<compile_context>
chip_gen: v7x
topology: tpu7x:2x2x1
jax: 0.10.0
libtpu: 0.0.40
codegen_flags: <defaults>
</compile_context>

<pallas_src>
import functools

import jax
import jax.numpy as jnp
from jax.experimental import pallas as pl
from jax.experimental.pallas import tpu as pltpu


def _round_up(n, m):
    return ((n + m - 1) // m) * m


def _pack_gate_cols(w_t, hidden, gate_w):
    """w_t: [rows, 4H], PyTorch gate order (i,f,g,o) along columns.
    Returns [rows, 4*gate_w] in order (i,f,o,g), each gate zero-padded to gate_w lanes."""
    H, G = hidden, gate_w
    blocks = {"i": w_t[:, 0:H], "f": w_t[:, H:2 * H],
              "g": w_t[:, 2 * H:3 * H], "o": w_t[:, 3 * H:4 * H]}
    padded = [jnp.pad(blocks[name], ((0, 0), (0, G - H)))
              for name in ("i", "f", "o", "g")]          # sigmoid gates first, tanh gate last
    return jnp.concatenate(padded, axis=1)


def lstm_fc_kernel(x_ref, wih_ref, whh_ref, b_ref, wfc_ref, bfc_ref,
                   out_ref, hs_ref, *, batch_p, seq_len, gate_w):
    """x_ref: [T*Bp, D_in] time-major flat. out_ref: [T*Bp, Dp]. hs_ref: [T*Bp, G]."""
    Bp, T, G = batch_p, seq_len, gate_w

    # Hoisted input projection for all steps, combined (b_ih + b_hh) folded in.
    xw = (jnp.dot(x_ref[...], wih_ref[...], preferred_element_type=jnp.float32)
          + b_ref[...])                                          # [T*Bp, 4G]

    whh = whh_ref[...]                                           # [G, 4G], f32 (no per-step cast)
    h = jnp.zeros((Bp, G), jnp.float32)
    c = jnp.zeros((Bp, G), jnp.float32)

    # T is small and static -> unrolled; only h @ W_hh^T stays on the serial chain.
    # TODO(synk): for large T switch to lax.fori_loop (+ modest unroll) over a grid
    # axis with h/c in scratch and xw/hs streamed per block (v7x 64 MiB VMEM plan).
    for t in range(T):
        gates = xw[t * Bp:(t + 1) * Bp, :] + jnp.dot(
            h, whh, preferred_element_type=jnp.float32)          # [Bp, 4G], full tiles
        # Gate order (i, f, o, g): one EUP tanh over the contiguous sigmoid slab,
        # one tanh for the g gate. sigmoid(x) = 0.5*(tanh(x/2)+1) avoids the divide.
        sig = 0.5 * (jnp.tanh(0.5 * gates[:, 0:3 * G]) + 1.0)
        i_g = sig[:, 0:G]
        f_g = sig[:, G:2 * G]
        o_g = sig[:, 2 * G:3 * G]
        g_g = jnp.tanh(gates[:, 3 * G:4 * G])
        c = f_g * c + i_g * g_g
        h = o_g * jnp.tanh(c)
        hs_ref[t * Bp:(t + 1) * Bp, :] = h                       # full (8,128)-tile store

    # Hoisted FC head: one matmul over all T*Bp rows + one lane-dense store.
    out_ref[...] = (jnp.dot(hs_ref[...], wfc_ref[...],
                            preferred_element_type=jnp.float32)
                    + bfc_ref[...])


def prepare_kernel_params(raw):
    """Convert PyTorch-style raw weights to the kernel's padded/reordered layout."""
    H = raw["w_hh"].shape[1]
    D_out = raw["w_fc"].shape[0]
    G = max(128, _round_up(H, 128))     # per-gate lane width == padded hidden width
    Dp = _round_up(D_out, 128)          # lane-dense FC / output width (500 -> 512)

    w_ih_p = _pack_gate_cols(raw["w_ih"].T, H, G)                        # [D_in, 4G]
    w_hh_p = jnp.pad(_pack_gate_cols(raw["w_hh"].T, H, G),
                     ((0, G - H), (0, 0)))                               # [G, 4G]
    b_p = _pack_gate_cols((raw["b_ih"] + raw["b_hh"]).reshape(1, 4 * H), H, G)  # [1, 4G]
    w_fc_p = jnp.pad(raw["w_fc"].T, ((0, G - H), (0, Dp - D_out)))       # [G, Dp]
    b_fc_p = jnp.pad(raw["b_fc"].reshape(1, D_out), ((0, 0), (0, Dp - D_out)))  # [1, Dp]
    return {"w_ih_p": w_ih_p, "w_hh_p": w_hh_p, "b_gates_p": b_p,
            "w_fc_p": w_fc_p, "b_fc_p": b_fc_p, "gate_w": G, "d_out": D_out}


def lstm_model_forward(x, kparams):
    """x: [B, T, D_in] float32. Returns [B, T, D_out] float32."""
    B, T, D_in = x.shape
    G = kparams["gate_w"]
    Dp = kparams["w_fc_p"].shape[1]
    D_out = kparams["d_out"]
    Bp = _round_up(B, 8)                # f32 sublane tile: full-tile per-step slices/stores

    # Zero-fill padded batch rows (sliced off at the end) and flatten time-major.
    x_p = jnp.pad(x, ((0, Bp - B), (0, 0), (0, 0)))
    x_tm = jnp.transpose(x_p, (1, 0, 2)).reshape(T * Bp, D_in)

    kernel = functools.partial(lstm_fc_kernel, batch_p=Bp, seq_len=T, gate_w=G)

    flops = (2 * T * Bp * D_in * 4 * G          # hoisted input projection
             + 2 * T * Bp * G * 4 * G           # recurrent matmuls
             + 2 * T * Bp * G * Dp)             # FC head
    transcendentals = 5 * T * Bp * G
    bytes_accessed = 4 * (x_tm.size + kparams["w_ih_p"].size + kparams["w_hh_p"].size
                          + kparams["b_gates_p"].size + kparams["w_fc_p"].size
                          + kparams["b_fc_p"].size + T * Bp * Dp)

    # Asserted VMEM footprint (everything resident: inputs, xw, hs scratch, output).
    vmem_bytes = 4 * (x_tm.size + kparams["w_ih_p"].size + kparams["w_hh_p"].size
                      + kparams["b_gates_p"].size + kparams["w_fc_p"].size
                      + kparams["b_fc_p"].size
                      + T * Bp * 4 * G          # xw intermediate
                      + T * Bp * G              # hs scratch
                      + 2 * T * Bp * Dp)        # out + staging
    vmem_limit = 32 * 1024 * 1024
    assert vmem_bytes < vmem_limit // 2, vmem_bytes
    # NOTE: at production T*B, re-derive this for v7x's 64 MiB VMEM (grid over T,
    # "arbitrary" axis, h/c carried in scratch) and add a "parallel" batch grid
    # axis so work shards across v7x's two TensorCores.

    vmem = pl.BlockSpec(memory_space=pltpu.MemorySpace.VMEM)
    out_flat = pl.pallas_call(
        kernel,
        out_shape=jax.ShapeDtypeStruct((T * Bp, Dp), jnp.float32),
        in_specs=[vmem] * 6,
        out_specs=vmem,
        scratch_shapes=[pltpu.VMEM((T * Bp, G), jnp.float32)],
        compiler_params=pltpu.CompilerParams(vmem_limit_bytes=vmem_limit),
        cost_estimate=pl.CostEstimate(flops=flops,
                                      transcendentals=transcendentals,
                                      bytes_accessed=bytes_accessed),
    )(x_tm, kparams["w_ih_p"], kparams["w_hh_p"], kparams["b_gates_p"],
      kparams["w_fc_p"], kparams["b_fc_p"])

    # Un-flatten (time-major -> batch-major), drop batch/lane padding.
    out = jnp.transpose(out_flat.reshape(T, Bp, Dp), (1, 0, 2))
    return out[:B, :, :D_out]


def init_torch_style_params(key, input_size, hidden_size, output_size):
    """PyTorch-layout params: W_ih [4H,D_in], W_hh [4H,H] (gate order i,f,g,o),
    b_ih/b_hh [4H], W_fc [D_out,H], b_fc [D_out]; uniform(-1/sqrt(H), 1/sqrt(H))."""
    ks = jax.random.split(key, 6)
    k = 1.0 / jnp.sqrt(hidden_size)
    H4 = 4 * hidden_size
    return {
        "w_ih": jax.random.uniform(ks[0], (H4, input_size), jnp.float32, -k, k),
        "w_hh": jax.random.uniform(ks[1], (H4, hidden_size), jnp.float32, -k, k),
        "b_ih": jax.random.uniform(ks[2], (H4,), jnp.float32, -k, k),
        "b_hh": jax.random.uniform(ks[3], (H4,), jnp.float32, -k, k),
        "w_fc": jax.random.uniform(ks[4], (output_size, hidden_size), jnp.float32, -k, k),
        "b_fc": jax.random.uniform(ks[5], (output_size,), jnp.float32, -k, k),
    }


def lstm_model_reference(x, raw):
    """Independent pure-JAX reference in PyTorch gate order / formulation."""
    B, T, _ = x.shape
    H = raw["w_hh"].shape[1]
    w_ih_t, w_hh_t = raw["w_ih"].T, raw["w_hh"].T
    b = (raw["b_ih"] + raw["b_hh"]).reshape(1, 4 * H)

    def step(carry, x_t):
        h, c = carry
        gates = x_t @ w_ih_t + h @ w_hh_t + b
        i = jax.nn.sigmoid(gates[:, 0 * H:1 * H])
        f = jax.nn.sigmoid(gates[:, 1 * H:2 * H])
        g = jnp.tanh(gates[:, 2 * H:3 * H])
        o = jax.nn.sigmoid(gates[:, 3 * H:4 * H])
        c = f * c + i * g
        h = o * jnp.tanh(c)
        return (h, c), h

    h0 = jnp.zeros((B, H), jnp.float32)
    c0 = jnp.zeros((B, H), jnp.float32)
    (_, _), hs = jax.lax.scan(step, (h0, c0), jnp.swapaxes(x, 0, 1))
    hs = jnp.swapaxes(hs, 0, 1)                            # [B, T, H]
    return hs @ raw["w_fc"].T + raw["b_fc"]


if __name__ == "__main__":
    input_size = 7
    hidden_size = 64
    output_size = 500
    batch = 2
    seq = 8

    key = jax.random.PRNGKey(0)
    k_x, k_p = jax.random.split(key)
    x = jax.random.normal(k_x, (batch, seq, input_size), jnp.float32)

    raw = init_torch_style_params(k_p, input_size, hidden_size, output_size)
    kparams = prepare_kernel_params(raw)

    out = jax.block_until_ready(lstm_model_forward(x, kparams))
    ref = jax.block_until_ready(lstm_model_reference(x, raw))

    assert out.shape == (batch, seq, output_size)
    max_err = float(jnp.max(jnp.abs(out - ref)))
    assert jnp.allclose(out, ref, atol=1e-4, rtol=1e-4), max_err

    print("KERNEL_OK")
</pallas_src>

<mosaic_0001>
module attributes {stable_mosaic.version = 11 : i64} {
  func.func @lstm_fc_kernel(%arg0: memref<64x7xf32, #tpu.memory_space<vmem>>, %arg1: memref<7x512xf32, #tpu.memory_space<vmem>>, %arg2: memref<128x512xf32, #tpu.memory_space<vmem>>, %arg3: memref<1x512xf32, #tpu.memory_space<vmem>>, %arg4: memref<128x512xf32, #tpu.memory_space<vmem>>, %arg5: memref<1x512xf32, #tpu.memory_space<vmem>>, %arg6: memref<64x512xf32, #tpu.memory_space<vmem>>, %arg7: memref<64x128xf32, #tpu.memory_space<vmem>>) attributes {dimension_semantics = [], scalar_prefetch = 0 : i64, scratch_operands = 1 : i64, tpu.core_type = #tpu.core_type<tc>} {
    %c0 = arith.constant 0 : index
    %c0_0 = arith.constant 0 : index
    %0 = vector.load %arg0[%c0, %c0_0] : memref<64x7xf32, #tpu.memory_space<vmem>>, vector<64x7xf32>
    %c0_1 = arith.constant 0 : index
    %c0_2 = arith.constant 0 : index
    %1 = vector.load %arg1[%c0_1, %c0_2] : memref<7x512xf32, #tpu.memory_space<vmem>>, vector<7x512xf32>
    %cst = arith.constant dense<0.000000e+00> : vector<64x512xf32>
    %2 = tpu.matmul %0, %1, %cst {dimension_numbers = #tpu.dot_dimension_numbers<[1], [0], [0], [1], [0, 0, 1, 1], [], []>} : vector<64x7xf32>, vector<7x512xf32>, vector<64x512xf32> -> vector<64x512xf32>
    %c0_3 = arith.constant 0 : index
    %c0_4 = arith.constant 0 : index
    %3 = vector.load %arg3[%c0_3, %c0_4] : memref<1x512xf32, #tpu.memory_space<vmem>>, vector<1x512xf32>
    %4 = vector.broadcast %3 : vector<1x512xf32> to vector<64x512xf32>
    %5 = arith.addf %2, %4 : vector<64x512xf32>
    %c0_5 = arith.constant 0 : index
    %c0_6 = arith.constant 0 : index
    %6 = vector.load %arg2[%c0_5, %c0_6] : memref<128x512xf32, #tpu.memory_space<vmem>>, vector<128x512xf32>
    %cst_7 = arith.constant 0.000000e+00 : f32
    %7 = vector.broadcast %cst_7 : f32 to vector<8x128xf32>
    %cst_8 = arith.constant 0.000000e+00 : f32
    %8 = vector.broadcast %cst_8 : f32 to vector<8x128xf32>
    %9 = vector.extract_strided_slice %5 {offsets = [0, 0], sizes = [8, 512], strides = [1, 1]} : vector<64x512xf32> to vector<8x512xf32>
    %cst_9 = arith.constant dense<0.000000e+00> : vector<8x512xf32>
    %10 = tpu.matmul %7, %6, %cst_9 {dimension_numbers = #tpu.dot_dimension_numbers<[1], [0], [0], [1], [0, 0, 1, 1], [], []>} : vector<8x128xf32>, vector<128x512xf32>, vector<8x512xf32> -> vector<8x512xf32>
    %11 = arith.addf %9, %10 : vector<8x512xf32>
    %12 = vector.extract_strided_slice %11 {offsets = [0, 0], sizes = [8, 384], strides = [1, 1]} : vector<8x512xf32> to vector<8x384xf32>
    %cst_10 = arith.constant 5.000000e-01 : f32
    %13 = vector.broadcast %cst_10 : f32 to vector<8x384xf32>
    %14 = arith.mulf %13, %12 : vector<8x384xf32>
    %15 = math.tanh %14 : vector<8x384xf32>
    %cst_11 = arith.constant 1.000000e+00 : f32
    %16 = vector.broadcast %cst_11 : f32 to vector<8x384xf32>
    %17 = arith.addf %15, %16 : vector<8x384xf32>
    %cst_12 = arith.constant 5.000000e-01 : f32
    %18 = vector.broadcast %cst_12 : f32 to vector<8x384xf32>
    %19 = arith.mulf %18, %17 : vector<8x384xf32>
    %20 = vector.extract_strided_slice %19 {offsets = [0, 0], sizes = [8, 128], strides = [1, 1]} : vector<8x384xf32> to vector<8x128xf32>
    %21 = vector.extract_strided_slice %19 {offsets = [0, 128], sizes = [8, 128], strides = [1, 1]} : vector<8x384xf32> to vector<8x128xf32>
    %22 = vector.extract_strided_slice %19 {offsets = [0, 256], sizes = [8, 128], strides = [1, 1]} : vector<8x384xf32> to vector<8x128xf32>
    %23 = vector.extract_strided_slice %11 {offsets = [0, 384], sizes = [8, 128], strides = [1, 1]} : vector<8x512xf32> to vector<8x128xf32>
    %24 = math.tanh %23 : vector<8x128xf32>
    %25 = arith.mulf %21, %8 : vector<8x128xf32>
    %26 = arith.mulf %20, %24 : vector<8x128xf32>
    %27 = arith.addf %25, %26 : vector<8x128xf32>
    %28 = math.tanh %27 : vector<8x128xf32>
    %29 = arith.mulf %22, %28 : vector<8x128xf32>
    %c0_13 = arith.constant 0 : index
    %c0_14 = arith.constant 0 : index
    %30 = vector.load %arg7[%c0_13, %c0_14] : memref<64x128xf32, #tpu.memory_space<vmem>>, vector<8x128xf32>
    tpu.vector_store %arg7[%c0_13, %c0_14], %29 {strides = array<i32>} : memref<64x128xf32, #tpu.memory_space<vmem>>, vector<8x128xf32>,
    %31 = vector.extract_strided_slice %5 {offsets = [8, 0], sizes = [8, 512], strides = [1, 1]} : vector<64x512xf32> to vector<8x512xf32>
    %cst_15 = arith.constant dense<0.000000e+00> : vector<8x512xf32>
    %32 = tpu.matmul %29, %6, %cst_15 {dimension_numbers = #tpu.dot_dimension_numbers<[1], [0], [0], [1], [0, 0, 1, 1], [], []>} : vector<8x128xf32>, vector<128x512xf32>, vector<8x512xf32> -> vector<8x512xf32>
    %33 = arith.addf %31, %32 : vector<8x512xf32>
    %34 = vector.extract_strided_slice %33 {offsets = [0, 0], sizes = [8, 384], strides = [1, 1]} : vector<8x512xf32> to vector<8x384xf32>
    %cst_16 = arith.constant 5.000000e-01 : f32
    %35 = vector.broadcast %cst_16 : f32 to vector<8x384xf32>
    %36 = arith.mulf %35, %34 : vector<8x384xf32>
    %37 = math.tanh %36 : vector<8x384xf32>
    %cst_17 = arith.constant 1.000000e+00 : f32
    %38 = vector.broadcast %cst_17 : f32 to vector<8x384xf32>
    %39 = arith.addf %37, %38 : vector<8x384xf32>
    %cst_18 = arith.constant 5.000000e-01 : f32
    %40 = vector.broadcast %cst_18 : f32 to vector<8x384xf32>
    %41 = arith.mulf %40, %39 : vector<8x384xf32>
    %42 = vector.extract_strided_slice %41 {offsets = [0, 0], sizes = [8, 128], strides = [1, 1]} : vector<8x384xf32> to vector<8x128xf32>
    %43 = vector.extract_strided_slice %41 {offsets = [0, 128], sizes = [8, 128], strides = [1, 1]} : vector<8x384xf32> to vector<8x128xf32>
    %44 = vector.extract_strided_slice %41 {offsets = [0, 256], sizes = [8, 128], strides = [1, 1]} : vector<8x384xf32> to vector<8x128xf32>
    %45 = vector.extract_strided_slice %33 {offsets = [0, 384], sizes = [8, 128], strides = [1, 1]} : vector<8x512xf32> to vector<8x128xf32>
    %46 = math.tanh %45 : vector<8x128xf32>
    %47 = arith.mulf %43, %27 : vector<8x128xf32>
    %48 = arith.mulf %42, %46 : vector<8x128xf32>
    %49 = arith.addf %47, %48 : vector<8x128xf32>
    %50 = math.tanh %49 : vector<8x128xf32>
    %51 = arith.mulf %44, %50 : vector<8x128xf32>
    %c8 = arith.constant 8 : index
    %c0_19 = arith.constant 0 : index
    %52 = vector.load %arg7[%c8, %c0_19] : memref<64x128xf32, #tpu.memory_space<vmem>>, vector<8x128xf32>
    tpu.vector_store %arg7[%c8, %c0_19], %51 {strides = array<i32>} : memref<64x128xf32, #tpu.memory_space<vmem>>, vector<8x128xf32>,
    %53 = vector.extract_strided_slice %5 {offsets = [16, 0], sizes = [8, 512], strides = [1, 1]} : vector<64x512xf32> to vector<8x512xf32>
    %cst_20 = arith.constant dense<0.000000e+00> : vector<8x512xf32>
    %54 = tpu.matmul %51, %6, %cst_20 {dimension_numbers = #tpu.dot_dimension_numbers<[1], [0], [0], [1], [0, 0, 1, 1], [], []>} : vector<8x128xf32>, vector<128x512xf32>, vector<8x512xf32> -> vector<8x512xf32>
    %55 = arith.addf %53, %54 : vector<8x512xf32>
    %56 = vector.extract_strided_slice %55 {offsets = [0, 0], sizes = [8, 384], strides = [1, 1]} : vector<8x512xf32> to vector<8x384xf32>
    %cst_21 = arith.constant 5.000000e-01 : f32
    %57 = vector.broadcast %cst_21 : f32 to vector<8x384xf32>
    %58 = arith.mulf %57, %56 : vector<8x384xf32>
    %59 = math.tanh %58 : vector<8x384xf32>
    %cst_22 = arith.constant 1.000000e+00 : f32
    %60 = vector.broadcast %cst_22 : f32 to vector<8x384xf32>
    %61 = arith.addf %59, %60 : vector<8x384xf32>
    %cst_23 = arith.constant 5.000000e-01 : f32
    %62 = vector.broadcast %cst_23 : f32 to vector<8x384xf32>
    %63 = arith.mulf %62, %61 : vector<8x384xf32>
    %64 = vector.extract_strided_slice %63 {offsets = [0, 0], sizes = [8, 128], strides = [1, 1]} : vector<8x384xf32> to vector<8x128xf32>
    %65 = vector.extract_strided_slice %63 {offsets = [0, 128], sizes = [8, 128], strides = [1, 1]} : vector<8x384xf32> to vector<8x128xf32>
    %66 = vector.extract_strided_slice %63 {offsets = [0, 256], sizes = [8, 128], strides = [1, 1]} : vector<8x384xf32> to vector<8x128xf32>
    %67 = vector.extract_strided_slice %55 {offsets = [0, 384], sizes = [8, 128], strides = [1, 1]} : vector<8x512xf32> to vector<8x128xf32>
    %68 = math.tanh %67 : vector<8x128xf32>
    %69 = arith.mulf %65, %49 : vector<8x128xf32>
    %70 = arith.mulf %64, %68 : vector<8x128xf32>
    %71 = arith.addf %69, %70 : vector<8x128xf32>
    %72 = math.tanh %71 : vector<8x128xf32>
    %73 = arith.mulf %66, %72 : vector<8x128xf32>
    %c16 = arith.constant 16 : index
    %c0_24 = arith.constant 0 : index
    %74 = vector.load %arg7[%c16, %c0_24] : memref<64x128xf32, #tpu.memory_space<vmem>>, vector<8x128xf32>
    tpu.vector_store %arg7[%c16, %c0_24], %73 {strides = array<i32>} : memref<64x128xf32, #tpu.memory_space<vmem>>, vector<8x128xf32>,
    %75 = vector.extract_strided_slice %5 {offsets = [24, 0], sizes = [8, 512], strides = [1, 1]} : vector<64x512xf32> to vector<8x512xf32>
    %cst_25 = arith.constant dense<0.000000e+00> : vector<8x512xf32>
    %76 = tpu.matmul %73, %6, %cst_25 {dimension_numbers = #tpu.dot_dimension_numbers<[1], [0], [0], [1], [0, 0, 1, 1], [], []>} : vector<8x128xf32>, vector<128x512xf32>, vector<8x512xf32> -> vector<8x512xf32>
    %77 = arith.addf %75, %76 : vector<8x512xf32>
    %78 = vector.extract_strided_slice %77 {offsets = [0, 0], sizes = [8, 384], strides = [1, 1]} : vector<8x512xf32> to vector<8x384xf32>
    %cst_26 = arith.constant 5.000000e-01 : f32
    %79 = vector.broadcast %cst_26 : f32 to vector<8x384xf32>
    %80 = arith.mulf %79, %78 : vector<8x384xf32>
    %81 = math.tanh %80 : vector<8x384xf32>
    %cst_27 = arith.constant 1.000000e+00 : f32
    %82 = vector.broadcast %cst_27 : f32 to vector<8x384xf32>
    %83 = arith.addf %81, %82 : vector<8x384xf32>
    %cst_28 = arith.constant 5.000000e-01 : f32
    %84 = vector.broadcast %cst_28 : f32 to vector<8x384xf32>
    %85 = arith.mulf %84, %83 : vector<8x384xf32>
    %86 = vector.extract_strided_slice %85 {offsets = [0, 0], sizes = [8, 128], strides = [1, 1]} : vector<8x384xf32> to vector<8x128xf32>
    %87 = vector.extract_strided_slice %85 {offsets = [0, 128], sizes = [8, 128], strides = [1, 1]} : vector<8x384xf32> to vector<8x128xf32>
    %88 = vector.extract_strided_slice %85 {offsets = [0, 256], sizes = [8, 128], strides = [1, 1]} : vector<8x384xf32> to vector<8x128xf32>
    %89 = vector.extract_strided_slice %77 {offsets = [0, 384], sizes = [8, 128], strides = [1, 1]} : vector<8x512xf32> to vector<8x128xf32>
    %90 = math.tanh %89 : vector<8x128xf32>
    %91 = arith.mulf %87, %71 : vector<8x128xf32>
    %92 = arith.mulf %86, %90 : vector<8x128xf32>
    %93 = arith.addf %91, %92 : vector<8x128xf32>
    %94 = math.tanh %93 : vector<8x128xf32>
    %95 = arith.mulf %88, %94 : vector<8x128xf32>
    %c24 = arith.constant 24 : index
    %c0_29 = arith.constant 0 : index
    %96 = vector.load %arg7[%c24, %c0_29] : memref<64x128xf32, #tpu.memory_space<vmem>>, vector<8x128xf32>
    tpu.vector_store %arg7[%c24, %c0_29], %95 {strides = array<i32>} : memref<64x128xf32, #tpu.memory_space<vmem>>, vector<8x128xf32>,
    %97 = vector.extract_strided_slice %5 {offsets = [32, 0], sizes = [8, 512], strides = [1, 1]} : vector<64x512xf32> to vector<8x512xf32>
    %cst_30 = arith.constant dense<0.000000e+00> : vector<8x512xf32>
    %98 = tpu.matmul %95, %6, %cst_30 {dimension_numbers = #tpu.dot_dimension_numbers<[1], [0], [0], [1], [0, 0, 1, 1], [], []>} : vector<8x128xf32>, vector<128x512xf32>, vector<8x512xf32> -> vector<8x512xf32>
    %99 = arith.addf %97, %98 : vector<8x512xf32>
    %100 = vector.extract_strided_slice %99 {offsets = [0, 0], sizes = [8, 384], strides = [1, 1]} : vector<8x512xf32> to vector<8x384xf32>
    %cst_31 = arith.constant 5.000000e-01 : f32
    %101 = vector.broadcast %cst_31 : f32 to vector<8x384xf32>
    %102 = arith.mulf %101, %100 : vector<8x384xf32>
    %103 = math.tanh %102 : vector<8x384xf32>
    %cst_32 = arith.constant 1.000000e+00 : f32
    %104 = vector.broadcast %cst_32 : f32 to vector<8x384xf32>
    %105 = arith.addf %103, %104 : vector<8x384xf32>
    %cst_33 = arith.constant 5.000000e-01 : f32
    %106 = vector.broadcast %cst_33 : f32 to vector<8x384xf32>
    %107 = arith.mulf %106, %105 : vector<8x384xf32>
    %108 = vector.extract_strided_slice %107 {offsets = [0, 0], sizes = [8, 128], strides = [1, 1]} : vector<8x384xf32> to vector<8x128xf32>
    %109 = vector.extract_strided_slice %107 {offsets = [0, 128], sizes = [8, 128], strides = [1, 1]} : vector<8x384xf32> to vector<8x128xf32>
    %110 = vector.extract_strided_slice %107 {offsets = [0, 256], sizes = [8, 128], strides = [1, 1]} : vector<8x384xf32> to vector<8x128xf32>
    %111 = vector.extract_strided_slice %99 {offsets = [0, 384], sizes = [8, 128], strides = [1, 1]} : vector<8x512xf32> to vector<8x128xf32>
    %112 = math.tanh %111 : vector<8x128xf32>
    %113 = arith.mulf %109, %93 : vector<8x128xf32>
    %114 = arith.mulf %108, %112 : vector<8x128xf32>
    %115 = arith.addf %113, %114 : vector<8x128xf32>
    %116 = math.tanh %115 : vector<8x128xf32>
    %117 = arith.mulf %110, %116 : vector<8x128xf32>
    %c32 = arith.constant 32 : index
    %c0_34 = arith.constant 0 : index
    %118 = vector.load %arg7[%c32, %c0_34] : memref<64x128xf32, #tpu.memory_space<vmem>>, vector<8x128xf32>
    tpu.vector_store %arg7[%c32, %c0_34], %117 {strides = array<i32>} : memref<64x128xf32, #tpu.memory_space<vmem>>, vector<8x128xf32>,
    %119 = vector.extract_strided_slice %5 {offsets = [40, 0], sizes = [8, 512], strides = [1, 1]} : vector<64x512xf32> to vector<8x512xf32>
    %cst_35 = arith.constant dense<0.000000e+00> : vector<8x512xf32>
    %120 = tpu.matmul %117, %6, %cst_35 {dimension_numbers = #tpu.dot_dimension_numbers<[1], [0], [0], [1], [0, 0, 1, 1], [], []>} : vector<8x128xf32>, vector<128x512xf32>, vector<8x512xf32> -> vector<8x512xf32>
    %121 = arith.addf %119, %120 : vector<8x512xf32>
    %122 = vector.extract_strided_slice %121 {offsets = [0, 0], sizes = [8, 384], strides = [1, 1]} : vector<8x512xf32> to vector<8x384xf32>
    %cst_36 = arith.constant 5.000000e-01 : f32
    %123 = vector.broadcast %cst_36 : f32 to vector<8x384xf32>
    %124 = arith.mulf %123, %122 : vector<8x384xf32>
    %125 = math.tanh %124 : vector<8x384xf32>
    %cst_37 = arith.constant 1.000000e+00 : f32
    %126 = vector.broadcast %cst_37 : f32 to vector<8x384xf32>
    %127 = arith.addf %125, %126 : vector<8x384xf32>
    %cst_38 = arith.constant 5.000000e-01 : f32
    %128 = vector.broadcast %cst_38 : f32 to vector<8x384xf32>
    %129 = arith.mulf %128, %127 : vector<8x384xf32>
    %130 = vector.extract_strided_slice %129 {offsets = [0, 0], sizes = [8, 128], strides = [1, 1]} : vector<8x384xf32> to vector<8x128xf32>
    %131 = vector.extract_strided_slice %129 {offsets = [0, 128], sizes = [8, 128], strides = [1, 1]} : vector<8x384xf32> to vector<8x128xf32>
    %132 = vector.extract_strided_slice %129 {offsets = [0, 256], sizes = [8, 128], strides = [1, 1]} : vector<8x384xf32> to vector<8x128xf32>
    %133 = vector.extract_strided_slice %121 {offsets = [0, 384], sizes = [8, 128], strides = [1, 1]} : vector<8x512xf32> to vector<8x128xf32>
    %134 = math.tanh %133 : vector<8x128xf32>
    %135 = arith.mulf %131, %115 : vector<8x128xf32>
    %136 = arith.mulf %130, %134 : vector<8x128xf32>
    %137 = arith.addf %135, %136 : vector<8x128xf32>
    %138 = math.tanh %137 : vector<8x128xf32>
    %139 = arith.mulf %132, %138 : vector<8x128xf32>
    %c40 = arith.constant 40 : index
    %c0_39 = arith.constant 0 : index
    %140 = vector.load %arg7[%c40, %c0_39] : memref<64x128xf32, #tpu.memory_space<vmem>>, vector<8x128xf32>
    tpu.vector_store %arg7[%c40, %c0_39], %139 {strides = array<i32>} : memref<64x128xf32, #tpu.memory_space<vmem>>, vector<8x128xf32>,
    %141 = vector.extract_strided_slice %5 {offsets = [48, 0], sizes = [8, 512], strides = [1, 1]} : vector<64x512xf32> to vector<8x512xf32>
    %cst_40 = arith.constant dense<0.000000e+00> : vector<8x512xf32>
    %142 = tpu.matmul %139, %6, %cst_40 {dimension_numbers = #tpu.dot_dimension_numbers<[1], [0], [0], [1], [0, 0, 1, 1], [], []>} : vector<8x128xf32>, vector<128x512xf32>, vector<8x512xf32> -> vector<8x512xf32>
    %143 = arith.addf %141, %142 : vector<8x512xf32>
    %144 = vector.extract_strided_slice %143 {offsets = [0, 0], sizes = [8, 384], strides = [1, 1]} : vector<8x512xf32> to vector<8x384xf32>
    %cst_41 = arith.constant 5.000000e-01 : f32
    %145 = vector.broadcast %cst_41 : f32 to vector<8x384xf32>
    %146 = arith.mulf %145, %144 : vector<8x384xf32>
    %147 = math.tanh %146 : vector<8x384xf32>
    %cst_42 = arith.constant 1.000000e+00 : f32
    %148 = vector.broadcast %cst_42 : f32 to vector<8x384xf32>
    %149 = arith.addf %147, %148 : vector<8x384xf32>
    %cst_43 = arith.constant 5.000000e-01 : f32
    %150 = vector.broadcast %cst_43 : f32 to vector<8x384xf32>
    %151 = arith.mulf %150, %149 : vector<8x384xf32>
    %152 = vector.extract_strided_slice %151 {offsets = [0, 0], sizes = [8, 128], strides = [1, 1]} : vector<8x384xf32> to vector<8x128xf32>
    %153 = vector.extract_strided_slice %151 {offsets = [0, 128], sizes = [8, 128], strides = [1, 1]} : vector<8x384xf32> to vector<8x128xf32>
    %154 = vector.extract_strided_slice %151 {offsets = [0, 256], sizes = [8, 128], strides = [1, 1]} : vector<8x384xf32> to vector<8x128xf32>
    %155 = vector.extract_strided_slice %143 {offsets = [0, 384], sizes = [8, 128], strides = [1, 1]} : vector<8x512xf32> to vector<8x128xf32>
    %156 = math.tanh %155 : vector<8x128xf32>
    %157 = arith.mulf %153, %137 : vector<8x128xf32>
    %158 = arith.mulf %152, %156 : vector<8x128xf32>
    %159 = arith.addf %157, %158 : vector<8x128xf32>
    %160 = math.tanh %159 : vector<8x128xf32>
    %161 = arith.mulf %154, %160 : vector<8x128xf32>
    %c48 = arith.constant 48 : index
    %c0_44 = arith.constant 0 : index
    %162 = vector.load %arg7[%c48, %c0_44] : memref<64x128xf32, #tpu.memory_space<vmem>>, vector<8x128xf32>
    tpu.vector_store %arg7[%c48, %c0_44], %161 {strides = array<i32>} : memref<64x128xf32, #tpu.memory_space<vmem>>, vector<8x128xf32>,
    %163 = vector.extract_strided_slice %5 {offsets = [56, 0], sizes = [8, 512], strides = [1, 1]} : vector<64x512xf32> to vector<8x512xf32>
    %cst_45 = arith.constant dense<0.000000e+00> : vector<8x512xf32>
    %164 = tpu.matmul %161, %6, %cst_45 {dimension_numbers = #tpu.dot_dimension_numbers<[1], [0], [0], [1], [0, 0, 1, 1], [], []>} : vector<8x128xf32>, vector<128x512xf32>, vector<8x512xf32> -> vector<8x512xf32>
    %165 = arith.addf %163, %164 : vector<8x512xf32>
    %166 = vector.extract_strided_slice %165 {offsets = [0, 0], sizes = [8, 384], strides = [1, 1]} : vector<8x512xf32> to vector<8x384xf32>
    %cst_46 = arith.constant 5.000000e-01 : f32
    %167 = vector.broadcast %cst_46 : f32 to vector<8x384xf32>
    %168 = arith.mulf %167, %166 : vector<8x384xf32>
    %169 = math.tanh %168 : vector<8x384xf32>
    %cst_47 = arith.constant 1.000000e+00 : f32
    %170 = vector.broadcast %cst_47 : f32 to vector<8x384xf32>
    %171 = arith.addf %169, %170 : vector<8x384xf32>
    %cst_48 = arith.constant 5.000000e-01 : f32
    %172 = vector.broadcast %cst_48 : f32 to vector<8x384xf32>
    %173 = arith.mulf %172, %171 : vector<8x384xf32>
    %174 = vector.extract_strided_slice %173 {offsets = [0, 0], sizes = [8, 128], strides = [1, 1]} : vector<8x384xf32> to vector<8x128xf32>
    %175 = vector.extract_strided_slice %173 {offsets = [0, 128], sizes = [8, 128], strides = [1, 1]} : vector<8x384xf32> to vector<8x128xf32>
    %176 = vector.extract_strided_slice %173 {offsets = [0, 256], sizes = [8, 128], strides = [1, 1]} : vector<8x384xf32> to vector<8x128xf32>
    %177 = vector.extract_strided_slice %165 {offsets = [0, 384], sizes = [8, 128], strides = [1, 1]} : vector<8x512xf32> to vector<8x128xf32>
    %178 = math.tanh %177 : vector<8x128xf32>
    %179 = arith.mulf %175, %159 : vector<8x128xf32>
    %180 = arith.mulf %174, %178 : vector<8x128xf32>
    %181 = arith.addf %179, %180 : vector<8x128xf32>
    %182 = math.tanh %181 : vector<8x128xf32>
    %183 = arith.mulf %176, %182 : vector<8x128xf32>
    %c56 = arith.constant 56 : index
    %c0_49 = arith.constant 0 : index
    %184 = vector.load %arg7[%c56, %c0_49] : memref<64x128xf32, #tpu.memory_space<vmem>>, vector<8x128xf32>
    tpu.vector_store %arg7[%c56, %c0_49], %183 {strides = array<i32>} : memref<64x128xf32, #tpu.memory_space<vmem>>, vector<8x128xf32>,
    %c0_50 = arith.constant 0 : index
    %c0_51 = arith.constant 0 : index
    %185 = vector.load %arg7[%c0_50, %c0_51] : memref<64x128xf32, #tpu.memory_space<vmem>>, vector<64x128xf32>
    %c0_52 = arith.constant 0 : index
    %c0_53 = arith.constant 0 : index
    %186 = vector.load %arg4[%c0_52, %c0_53] : memref<128x512xf32, #tpu.memory_space<vmem>>, vector<128x512xf32>
    %cst_54 = arith.constant dense<0.000000e+00> : vector<64x512xf32>
    %187 = tpu.matmul %185, %186, %cst_54 {dimension_numbers = #tpu.dot_dimension_numbers<[1], [0], [0], [1], [0, 0, 1, 1], [], []>} : vector<64x128xf32>, vector<128x512xf32>, vector<64x512xf32> -> vector<64x512xf32>
    %c0_55 = arith.constant 0 : index
    %c0_56 = arith.constant 0 : index
    %188 = vector.load %arg5[%c0_55, %c0_56] : memref<1x512xf32, #tpu.memory_space<vmem>>, vector<1x512xf32>
    %189 = vector.broadcast %188 : vector<1x512xf32> to vector<64x512xf32>
    %190 = arith.addf %187, %189 : vector<64x512xf32>
    %c0_57 = arith.constant 0 : index
    %c0_58 = arith.constant 0 : index
    %191 = vector.load %arg6[%c0_57, %c0_58] : memref<64x512xf32, #tpu.memory_space<vmem>>, vector<64x512xf32>
    tpu.vector_store %arg6[%c0_57, %c0_58], %190 {strides = array<i32>} : memref<64x512xf32, #tpu.memory_space<vmem>>, vector<64x512xf32>,
    return
  }
}

</mosaic_0001>

<llo_original>
// kernel: tpu_custom_call.1
$region0: #{tpu_custom_call.1}
  #allocation0 [shape = 'u32[]', space=smem, size = 0x4, offset = 0x4, fixed_abs, tag = 'smem constant byte address 0x4 - core index']
  #allocation1 [shape = 'u32[144,128]{1,0:T(1,128)}', space=vmem, size = 0x12000, scoped, tag = 'internal scratch']
  #allocation2 [shape = 'f32[64,128]{1,0:T(8,128)}', space=vmem, size = 0x8000, scoped, tag = 'scratch operand']
  %s0 = inlined_call_operand.vmem [shape: f32[64,7], index: 0, kind: input, shape index: {}]
  %s1 = inlined_call_operand.vmem [shape: f32[7,512], index: 1, kind: input, shape index: {}]
  %s2 = inlined_call_operand.hbm [shape: f32[128,512], index: 2, kind: input, shape index: {}]
  %s3 = inlined_call_operand.vmem [shape: f32[1,512], index: 3, kind: input, shape index: {}]
  %s4 = inlined_call_operand.hbm [shape: f32[128,512], index: 4, kind: input, shape index: {}]
  %s5 = inlined_call_operand.vmem [shape: f32[1,512], index: 5, kind: input, shape index: {}]
  %s6 = inlined_call_operand.hbm [shape: f32[64,512], index: 6, kind: output, shape index: {}]
  %s7 = sld [smem:[#allocation0]]
  $region42: #{tpu_custom_call.1} parent=0
    _
  %s9 = ssub.s32 1, %s7
  %s10 = scalar_select 0, %s9, %s7
  $region1: #{tpu_custom_call.1} parent=0
    #allocation3 [shape = 'u8[262144]{0}', space=vmem, size = 0x40000, scoped, tag = 'input window, operand 2, single buffered']
    #allocation4 [shape = 's32[1]{0}', space=sflag, size = 0x4, scoped, tag = 'scoped memory for tpu_custom_call.1']
    #allocation5 [shape = 's32[1]{0}', space=sflag, size = 0x4, scoped, tag = 'scoped memory for tpu_custom_call.1']
    #allocation6 [shape = 'u8[262144]{0}', space=vmem, size = 0x40000, scoped, tag = 'input window, operand 4, single buffered']
    #allocation7 [shape = 's32[1]{0}', space=sflag, size = 0x4, scoped, tag = 'scoped memory for tpu_custom_call.1']
    #allocation8 [shape = 'u8[131072]{0}', space=vmem, size = 0x20000, scoped, tag = 'output window, operand 0, single buffered']
    %11 = vsyncpa [#allocation4], 0
    %12 = vsyncpa [#allocation7], 0
    %13 = vsyncpa [#allocation5], 0
    // Predicated region
    $region2: #{tpu_custom_call.1} parent=1 // pred_check
      _
    $region3: #{tpu_custom_call.1} parent=1 // pred_check_branch
      %15 = sbr.rel (0) target = $region5
    $region4: #{tpu_custom_call.1} parent=1 // pred_region
      _
    $region5: #{tpu_custom_call.1} parent=1 // pred_fallthru
      _
    // Predicated region
    $region6: #{tpu_custom_call.1} parent=1 // pred_check
      _
    $region7: #{tpu_custom_call.1} parent=1 // pred_check_branch
      %17 = sbr.rel (0) target = $region9
    $region8: #{tpu_custom_call.1} parent=1 // pred_region
      _
    $region9: #{tpu_custom_call.1} parent=1 // pred_fallthru
      _
    // Predicated region
    $region10: #{tpu_custom_call.1} parent=1 // pred_check
      _
    $region11: #{tpu_custom_call.1} parent=1 // pred_check_branch
      %19 = sbr.rel (0) target = $region13
    $region12: #{tpu_custom_call.1} parent=1 // pred_region
      %s21 = ssub.s32 8192, 8192
      %22 = vsyncadd [#allocation4], %s21
      %s23 = sshll.u32 [#allocation3], 4
      %s24 = int_to_ptr.vmem [resolvable:$true] %s23
      %29 = dma.hbm_to_vmem [thread:$0]  %s2, 8192, %s24, [#allocation4], 512, 512, 32
    $region13: #{tpu_custom_call.1} parent=1 // pred_fallthru
      _
    // Predicated region
    $region14: #{tpu_custom_call.1} parent=1 // pred_check
      _
    $region15: #{tpu_custom_call.1} parent=1 // pred_check_branch
      %31 = sbr.rel (0) target = $region17
    $region16: #{tpu_custom_call.1} parent=1 // pred_region
      _
    $region17: #{tpu_custom_call.1} parent=1 // pred_fallthru
      _
    // Predicated region
    $region18: #{tpu_custom_call.1} parent=1 // pred_check
      _
    $region19: #{tpu_custom_call.1} parent=1 // pred_check_branch
      %33 = sbr.rel (0) target = $region21
    $region20: #{tpu_custom_call.1} parent=1 // pred_region
      %s35 = ssub.s32 8192, 8192
      %36 = vsyncadd [#allocation7], %s35
      %s37 = sshll.u32 [#allocation6], 4
      %s38 = int_to_ptr.vmem [resolvable:$true] %s37
      %43 = dma.hbm_to_vmem [thread:$0]  %s4, 8192, %s38, [#allocation7], 512, 512, 32
    $region21: #{tpu_custom_call.1} parent=1 // pred_fallthru
      _
    // Predicated region
    $region22: #{tpu_custom_call.1} parent=1 // pred_check
      _
    $region23: #{tpu_custom_call.1} parent=1 // pred_check_branch
      %45 = sbr.rel (0) target = $region25
    $region24: #{tpu_custom_call.1} parent=1 // pred_region
      _
    $region25: #{tpu_custom_call.1} parent=1 // pred_fallthru
      _
    // Predicated region
    $region26: #{tpu_custom_call.1} parent=1 // pred_check
      _
    $region27: #{tpu_custom_call.1} parent=1 // pred_check_branch
      %47 = sbr.rel (0) target = $region29
    $region28: #{tpu_custom_call.1} parent=1 // pred_region
      %48 = dma.done [#allocation4], 8192
    $region29: #{tpu_custom_call.1} parent=1 // pred_fallthru
      _
    // Predicated region
    $region30: #{tpu_custom_call.1} parent=1 // pred_check
      _
    $region31: #{tpu_custom_call.1} parent=1 // pred_check_branch
      %50 = sbr.rel (0) target = $region33
    $region32: #{tpu_custom_call.1} parent=1 // pred_region
      %51 = dma.done [#allocation7], 8192
    $region33: #{tpu_custom_call.1} parent=1 // pred_fallthru
      _
    %v52 = vld [vmem:[%s0] sm:$0xff]
    %v53 = vld [vmem:[%s0 + $0x8] sm:$0xff]
    %v54 = vld [vmem:[%s0 + $0x10] sm:$0xff]
    %v55 = vld [vmem:[%s0 + $0x18] sm:$0xff]
    %v56 = vld [vmem:[%s0 + $0x20] sm:$0xff]
    %v57 = vld [vmem:[%s0 + $0x28] sm:$0xff]
    %v58 = vld [vmem:[%s0 + $0x30] sm:$0xff]
    %v59 = vld [vmem:[%s0 + $0x38] sm:$0xff]
    %v60 = vld [vmem:[%s1] sm:$0x7f]
    %v61 = vld [vmem:[%s1 + $0x8] sm:$0x7f]
    %v62 = vld [vmem:[%s1 + $0x10] sm:$0x7f]
    %v63 = vld [vmem:[%s1 + $0x18] sm:$0x7f]
    %v64 = vld [vmem:[%s3] sm:$0xf]
    %v66 = vlaneseq
    %v67 = vshrl.u32 %v66, 7
    %v68 = vsub.s32 0, %v67
    %v69 = vrot.slane %v64, %v68
    %v70 = vlaneseq
    %v71 = vshrl.u32 %v70, 7
    %v72 = vsub.s32 1, %v71
    %v73 = vrot.slane %v64, %v72
    %v74 = vlaneseq
    %v75 = vshrl.u32 %v74, 7
    %v76 = vsub.s32 2, %v75
    %v77 = vrot.slane %v64, %v76
    %v78 = vlaneseq
    %v79 = vshrl.u32 %v78, 7
    %v80 = vsub.s32 3, %v79
    %v81 = vrot.slane %v64, %v80
    %vm86 = vcmask 56320
    %v88 = vsel %vm86, %v52, 0
    %v91 = vsel %vm86, %v53, 0
    %v94 = vsel %vm86, %v54, 0
    %v97 = vsel %vm86, %v55, 0
    %v100 = vsel %vm86, %v56, 0
    %v103 = vsel %vm86, %v57, 0
    %v106 = vsel %vm86, %v58, 0
    %v109 = vsel %vm86, %v59, 0
    %vm111 = vcmask 1046528
    %v113 = vsel %vm111, %v60, 0
    %v116 = vsel %vm111, %v61, 0
    %v119 = vsel %vm111, %v62, 0
    %v122 = vsel %vm111, %v63, 0
    %124 = vmatprep.subr.mxu0 %v116
    %125 = vmatpush1.msra.mxu0 %v113
    %126 = vmatprep.subr.mxu0 0.0
    %127 = vmatpush1.msra.mxu0 0.0
    %128 = vmatprep.subr.mxu0 0.0
    %129 = vmatpush1.msra.mxu0 0.0
    %130 = vmatprep.subr.mxu0 0.0
    %131 = vmatpush1.msra.mxu0 0.0
    %132 = vmatprep.subr.mxu0 0.0
    %133 = vmatpush1.msra.mxu0 0.0
    %134 = vmatprep.subr.mxu0 0.0
    %135 = vmatpush1.msra.mxu0 0.0
    %136 = vmatprep.subr.mxu0 0.0
    %137 = vmatpush1.msra.mxu0 0.0
    %138 = vmatprep.subr.mxu0 0.0
    %139 = vmatpush1.msra.mxu0 0.0
    %140 = vmatprep.subr.mxu0 0.0
    %141 = vmatpush1.msra.mxu0 0.0
    %142 = vmatprep.subr.mxu0 0.0
    %143 = vmatpush1.msra.mxu0 0.0
    %144 = vmatprep.subr.mxu0 0.0
    %145 = vmatpush1.msra.mxu0 0.0
    %146 = vmatprep.subr.mxu0 0.0
    %147 = vmatpush1.msra.mxu0 0.0
    %148 = vmatprep.subr.mxu0 0.0
    %149 = vmatpush1.msra.mxu0 0.0
    %150 = vmatprep.subr.mxu0 0.0
    %151 = vmatpush1.msra.mxu0 0.0
    %152 = vmatprep.subr.mxu0 0.0
    %153 = vmatpush1.msra.mxu0 0.0
    %154 = vmatprep.subr.mxu0 0.0
    %155 = vmatpush1.msra.mxu0 0.0
    %156 = vmatprep.subr.mxu0 0.0
    %157 = vmatpush1.msra.mxu0 0.0
    %158 = vmatprep.subr.mxu0 0.0
    %159 = vmatpush1.msra.mxu0 0.0
    %160 = vmatprep.subr.mxu0 0.0
    %161 = vmatpush1.msra.mxu0 0.0
    %162 = vmatprep.subr.mxu0 0.0
    %163 = vmatpush1.msra.mxu0 0.0
    %164 = vmatprep.subr.mxu0 0.0
    %165 = vmatpush1.msra.mxu0 0.0
    %166 = vmatprep.subr.mxu0 0.0
    %167 = vmatpush1.msra.mxu0 0.0
    %168 = vmatprep.subr.mxu0 0.0
    %169 = vmatpush1.msra.mxu0 0.0
    %170 = vmatprep.subr.mxu0 0.0
    %171 = vmatpush1.msra.mxu0 0.0
    %172 = vmatprep.subr.mxu0 0.0
    %173 = vmatpush1.msra.mxu0 0.0
    %174 = vmatprep.subr.mxu0 0.0
    %175 = vmatpush1.msra.mxu0 0.0
    %176 = vmatprep.subr.mxu0 0.0
    %177 = vmatpush1.msra.mxu0 0.0
    %178 = vmatprep.subr.mxu0 0.0
    %179 = vmatpush1.msra.mxu0 0.0
    %180 = vmatprep.subr.mxu0 0.0
    %181 = vmatpush1.msra.mxu0 0.0
    %182 = vmatprep.subr.mxu0 0.0
    %183 = vmatpush1.msra.mxu0 0.0
    %184 = vmatprep.subr.mxu0 0.0
    %185 = vmatpush1.msra.mxu0 0.0
    %186 = vmatprep.subr.mxu0 0.0
    %187 = vmatpush1.msra.mxu0 0.0
    %188 = vmatprep.mubr.f32.mxu0 0.0
    %189 = vmatmul.mubr.f32.gmra.mrb[0].mxu0 %v88
    %v190 = vpop.f32.mrb[0].mxu0
    %v191 = vadd.f32 %v69, %v190
    %v192 = vpop.f32.mrb[0].mxu0
    %v193 = vadd.f32 %v73, %v192
    %194 = vmatprep.mubr.f32.mxu0 0.0
    %195 = vmatmul.mubr.f32.gmra.mrb[0].mxu0 %v91
    %v196 = vpop.f32.mrb[0].mxu0
    %v197 = vadd.f32 %v69, %v196
    %v198 = vpop.f32.mrb[0].mxu0
    %v199 = vadd.f32 %v73, %v198
    %200 = vmatprep.mubr.f32.mxu0 0.0
    %201 = vmatmul.mubr.f32.gmra.mrb[0].mxu0 %v94
    %v202 = vpop.f32.mrb[0].mxu0
    %v203 = vadd.f32 %v69, %v202
    %v204 = vpop.f32.mrb[0].mxu0
    %v205 = vadd.f32 %v73, %v204
    %206 = vmatprep.mubr.f32.mxu0 0.0
    %207 = vmatmul.mubr.f32.gmra.mrb[0].mxu0 %v97
    %v208 = vpop.f32.mrb[0].mxu0
    %v209 = vadd.f32 %v69, %v208
    %v210 = vpop.f32.mrb[0].mxu0
    %v211 = vadd.f32 %v73, %v210
    %212 = vmatprep.mubr.f32.mxu0 0.0
    %213 = vmatmul.mubr.f32.gmra.mrb[0].mxu0 %v100
    %v214 = vpop.f32.mrb[0].mxu0
    %v215 = vadd.f32 %v69, %v214
    %v216 = vpop.f32.mrb[0].mxu0
    %v217 = vadd.f32 %v73, %v216
    %218 = vmatprep.mubr.f32.mxu0 0.0
    %219 = vmatmul.mubr.f32.gmra.mrb[0].mxu0 %v103
    %v220 = vpop.f32.mrb[0].mxu0
    %v221 = vadd.f32 %v69, %v220
    %v222 = vpop.f32.mrb[0].mxu0
    %v223 = vadd.f32 %v73, %v222
    %224 = vmatprep.mubr.f32.mxu0 0.0
    %225 = vmatmul.mubr.f32.gmra.mrb[0].mxu0 %v106
    %v226 = vpop.f32.mrb[0].mxu0
    %v227 = vadd.f32 %v69, %v226
    %v228 = vpop.f32.mrb[0].mxu0
    %v229 = vadd.f32 %v73, %v228
    %230 = vmatprep.mubr.f32.mxu0 0.0
    %231 = vmatmul.mubr.f32.gmra.mrb[0].mxu0 %v109
    %v232 = vpop.f32.mrb[0].mxu0
    %v233 = vadd.f32 %v69, %v232
    %v234 = vpop.f32.mrb[0].mxu0
    %v235 = vadd.f32 %v73, %v234
    %236 = vdwg.mxu0
    %237 = vmatprep.subr.mxu0 %v122
    %238 = vmatpush1.msra.mxu0 %v119
    %239 = vmatprep.subr.mxu0 0.0
    %240 = vmatpush1.msra.mxu0 0.0
    %241 = vmatprep.subr.mxu0 0.0
    %242 = vmatpush1.msra.mxu0 0.0
    %243 = vmatprep.subr.mxu0 0.0
    %244 = vmatpush1.msra.mxu0 0.0
    %245 = vmatprep.subr.mxu0 0.0
    %246 = vmatpush1.msra.mxu0 0.0
    %247 = vmatprep.subr.mxu0 0.0
    %248 = vmatpush1.msra.mxu0 0.0
    %249 = vmatprep.subr.mxu0 0.0
    %250 = vmatpush1.msra.mxu0 0.0
    %251 = vmatprep.subr.mxu0 0.0
    %252 = vmatpush1.msra.mxu0 0.0
    %253 = vmatprep.subr.mxu0 0.0
    %254 = vmatpush1.msra.mxu0 0.0
    %255 = vmatprep.subr.mxu0 0.0
    %256 = vmatpush1.msra.mxu0 0.0
    %257 = vmatprep.subr.mxu0 0.0
    %258 = vmatpush1.msra.mxu0 0.0
    %259 = vmatprep.subr.mxu0 0.0
    %260 = vmatpush1.msra.mxu0 0.0
    %261 = vmatprep.subr.mxu0 0.0
    %262 = vmatpush1.msra.mxu0 0.0
    %263 = vmatprep.subr.mxu0 0.0
    %264 = vmatpush1.msra.mxu0 0.0
    %265 = vmatprep.subr.mxu0 0.0
    %266 = vmatpush1.msra.mxu0 0.0
    %267 = vmatprep.subr.mxu0 0.0
    %268 = vmatpush1.msra.mxu0 0.0
    %269 = vmatprep.subr.mxu0 0.0
    %270 = vmatpush1.msra.mxu0 0.0
    %271 = vmatprep.subr.mxu0 0.0
    %272 = vmatpush1.msra.mxu0 0.0
    %273 = vmatprep.subr.mxu0 0.0
    %274 = vmatpush1.msra.mxu0 0.0
    %275 = vmatprep.subr.mxu0 0.0
    %276 = vmatpush1.msra.mxu0 0.0
    %277 = vmatprep.subr.mxu0 0.0
    %278 = vmatpush1.msra.mxu0 0.0
    %279 = vmatprep.subr.mxu0 0.0
    %280 = vmatpush1.msra.mxu0 0.0
    %281 = vmatprep.subr.mxu0 0.0
    %282 = vmatpush1.msra.mxu0 0.0
    %283 = vmatprep.subr.mxu0 0.0
    %284 = vmatpush1.msra.mxu0 0.0
    %285 = vmatprep.subr.mxu0 0.0
    %286 = vmatpush1.msra.mxu0 0.0
    %287 = vmatprep.subr.mxu0 0.0
    %288 = vmatpush1.msra.mxu0 0.0
    %289 = vmatprep.subr.mxu0 0.0
    %290 = vmatpush1.msra.mxu0 0.0
    %291 = vmatprep.subr.mxu0 0.0
    %292 = vmatpush1.msra.mxu0 0.0
    %293 = vmatprep.subr.mxu0 0.0
    %294 = vmatpush1.msra.mxu0 0.0
    %295 = vmatprep.subr.mxu0 0.0
    %296 = vmatpush1.msra.mxu0 0.0
    %297 = vmatprep.subr.mxu0 0.0
    %298 = vmatpush1.msra.mxu0 0.0
    %299 = vmatprep.subr.mxu0 0.0
    %300 = vmatpush1.msra.mxu0 0.0
    %301 = vmatprep.mubr.f32.mxu0 0.0
    %302 = vmatmul.mubr.f32.gmra.mrb[0].mxu0 %v88
    %v303 = vpop.f32.mrb[0].mxu0
    %v304 = vadd.f32 %v77, %v303
    %v305 = vpop.f32.mrb[0].mxu0
    %v306 = vadd.f32 %v81, %v305
    %307 = vmatprep.mubr.f32.mxu0 0.0
    %308 = vmatmul.mubr.f32.gmra.mrb[0].mxu0 %v91
    %v309 = vpop.f32.mrb[0].mxu0
    %v310 = vadd.f32 %v77, %v309
    %v311 = vpop.f32.mrb[0].mxu0
    %v312 = vadd.f32 %v81, %v311
    %313 = vmatprep.mubr.f32.mxu0 0.0
    %314 = vmatmul.mubr.f32.gmra.mrb[0].mxu0 %v94
    %v315 = vpop.f32.mrb[0].mxu0
    %v316 = vadd.f32 %v77, %v315
    %v317 = vpop.f32.mrb[0].mxu0
    %v318 = vadd.f32 %v81, %v317
    %319 = vmatprep.mubr.f32.mxu0 0.0
    %320 = vmatmul.mubr.f32.gmra.mrb[0].mxu0 %v97
    %v321 = vpop.f32.mrb[0].mxu0
    %v322 = vadd.f32 %v77, %v321
    %v323 = vpop.f32.mrb[0].mxu0
    %v324 = vadd.f32 %v81, %v323
    %325 = vmatprep.mubr.f32.mxu0 0.0
    %326 = vmatmul.mubr.f32.gmra.mrb[0].mxu0 %v100
    %v327 = vpop.f32.mrb[0].mxu0
    %v328 = vadd.f32 %v77, %v327
    %v329 = vpop.f32.mrb[0].mxu0
    %v330 = vadd.f32 %v81, %v329
    %331 = vmatprep.mubr.f32.mxu0 0.0
    %332 = vmatmul.mubr.f32.gmra.mrb[0].mxu0 %v103
    %v333 = vpop.f32.mrb[0].mxu0
    %v334 = vadd.f32 %v77, %v333
    %v335 = vpop.f32.mrb[0].mxu0
    %v336 = vadd.f32 %v81, %v335
    %337 = vmatprep.mubr.f32.mxu0 0.0
    %338 = vmatmul.mubr.f32.gmra.mrb[0].mxu0 %v106
    %v339 = vpop.f32.mrb[0].mxu0
    %v340 = vadd.f32 %v77, %v339
    %v341 = vpop.f32.mrb[0].mxu0
    %v342 = vadd.f32 %v81, %v341
    %343 = vmatprep.mubr.f32.mxu0 0.0
    %344 = vmatmul.mubr.f32.gmra.mrb[0].mxu0 %v109
    %v345 = vpop.f32.mrb[0].mxu0
    %v346 = vadd.f32 %v77, %v345
    %v347 = vpop.f32.mrb[0].mxu0
    %v348 = vadd.f32 %v81, %v347
    %349 = vdwg.mxu0
    %v350 = vld [vmem:[#allocation3] sm:$0xff]
    %v351 = vld [vmem:[#allocation3 + $0x8] sm:$0xff]
    %v352 = vld [vmem:[#allocation3 + $0x10] sm:$0xff]
    %v353 = vld [vmem:[#allocation3 + $0x18] sm:$0xff]
    %v354 = vld [vmem:[#allocation3 + $0x20] sm:$0xff]
    %v355 = vld [vmem:[#allocation3 + $0x28] sm:$0xff]
    %v356 = vld [vmem:[#allocation3 + $0x30] sm:$0xff]
    %v357 = vld [vmem:[#allocation3 + $0x38] sm:$0xff]
    %v358 = vld [vmem:[#allocation3 + $0x40] sm:$0xff]
    %v359 = vld [vmem:[#allocation3 + $0x48] sm:$0xff]
    %v360 = vld [vmem:[#allocation3 + $0x50] sm:$0xff]
    %v361 = vld [vmem:[#allocation3 + $0x58] sm:$0xff]
    %v362 = vld [vmem:[#allocation3 + $0x60] sm:$0xff]
    %v363 = vld [vmem:[#allocation3 + $0x68] sm:$0xff]
    %v364 = vld [vmem:[#allocation3 + $0x70] sm:$0xff]
    %v365 = vld [vmem:[#allocation3 + $0x78] sm:$0xff]
    %v366 = vld [vmem:[#allocation3 + $0x80] sm:$0xff]
    %v367 = vld [vmem:[#allocation3 + $0x88] sm:$0xff]
    %v368 = vld [vmem:[#allocation3 + $0x90] sm:$0xff]
    %v369 = vld [vmem:[#allocation3 + $0x98] sm:$0xff]
    %v370 = vld [vmem:[#allocation3 + $0xa0] sm:$0xff]
    %v371 = vld [vmem:[#allocation3 + $0xa8] sm:$0xff]
    %v372 = vld [vmem:[#allocation3 + $0xb0] sm:$0xff]
    %v373 = vld [vmem:[#allocation3 + $0xb8] sm:$0xff]
    %v374 = vld [vmem:[#allocation3 + $0xc0] sm:$0xff]
    %v375 = vld [vmem:[#allocation3 + $0xc8] sm:$0xff]
    %v376 = vld [vmem:[#allocation3 + $0xd0] sm:$0xff]
    %v377 = vld [vmem:[#allocation3 + $0xd8] sm:$0xff]
    %v378 = vld [vmem:[#allocation3 + $0xe0] sm:$0xff]
    %v379 = vld [vmem:[#allocation3 + $0xe8] sm:$0xff]
    %v380 = vld [vmem:[#allocation3 + $0xf0] sm:$0xff]
    %v381 = vld [vmem:[#allocation3 + $0xf8] sm:$0xff]
    %v382 = vld [vmem:[#allocation3 + $0x100] sm:$0xff]
    %v383 = vld [vmem:[#allocation3 + $0x108] sm:$0xff]
    %v384 = vld [vmem:[#allocation3 + $0x110] sm:$0xff]
    %v385 = vld [vmem:[#allocation3 + $0x118] sm:$0xff]
    %v386 = vld [vmem:[#allocation3 + $0x120] sm:$0xff]
    %v387 = vld [vmem:[#allocation3 + $0x128] sm:$0xff]
    %v388 = vld [vmem:[#allocation3 + $0x130] sm:$0xff]
    %v389 = vld [vmem:[#allocation3 + $0x138] sm:$0xff]
    %v390 = vld [vmem:[#allocation3 + $0x140] sm:$0xff]
    %v391 = vld [vmem:[#allocation3 + $0x148] sm:$0xff]
    %v392 = vld [vmem:[#allocation3 + $0x150] sm:$0xff]
    %v393 = vld [vmem:[#allocation3 + $0x158] sm:$0xff]
    %v394 = vld [vmem:[#allocation3 + $0x160] sm:$0xff]
    %v395 = vld [vmem:[#allocation3 + $0x168] sm:$0xff]
    %v396 = vld [vmem:[#allocation3 + $0x170] sm:$0xff]
    %v397 = vld [vmem:[#allocation3 + $0x178] sm:$0xff]
    %v398 = vld [vmem:[#allocation3 + $0x180] sm:$0xff]
    %v399 = vld [vmem:[#allocation3 + $0x188] sm:$0xff]
    %v400 = vld [vmem:[#allocation3 + $0x190] sm:$0xff]
    %v401 = vld [vmem:[#allocation3 + $0x198] sm:$0xff]
    %v402 = vld [vmem:[#allocation3 + $0x1a0] sm:$0xff]
    %v403 = vld [vmem:[#allocation3 + $0x1a8] sm:$0xff]
    %v404 = vld [vmem:[#allocation3 + $0x1b0] sm:$0xff]
    %v405 = vld [vmem:[#allocation3 + $0x1b8] sm:$0xff]
    %v406 = vld [vmem:[#allocation3 + $0x1c0] sm:$0xff]
    %v407 = vld [vmem:[#allocation3 + $0x1c8] sm:$0xff]
    %v408 = vld [vmem:[#allocation3 + $0x1d0] sm:$0xff]
    %v409 = vld [vmem:[#allocation3 + $0x1d8] sm:$0xff]
    %v410 = vld [vmem:[#allocation3 + $0x1e0] sm:$0xff]
    %v411 = vld [vmem:[#allocation3 + $0x1e8] sm:$0xff]
    %v412 = vld [vmem:[#allocation3 + $0x1f0] sm:$0xff]
    %v413 = vld [vmem:[#allocation3 + $0x1f8] sm:$0xff]
    %414 = vmatprep.subr.mxu0 %v351
    %415 = vmatpush1.msra.mxu0 %v350
    %416 = vmatprep.subr.mxu0 %v355
    %417 = vmatpush1.msra.mxu0 %v354
    %418 = vmatprep.subr.mxu0 %v359
    %419 = vmatpush1.msra.mxu0 %v358
    %420 = vmatprep.subr.mxu0 %v363
    %421 = vmatpush1.msra.mxu0 %v362
    %422 = vmatprep.subr.mxu0 %v367
    %423 = vmatpush1.msra.mxu0 %v366
    %424 = vmatprep.subr.mxu0 %v371
    %425 = vmatpush1.msra.mxu0 %v370
    %426 = vmatprep.subr.mxu0 %v375
    %427 = vmatpush1.msra.mxu0 %v374
    %428 = vmatprep.subr.mxu0 %v379
    %429 = vmatpush1.msra.mxu0 %v378
    %430 = vmatprep.subr.mxu0 %v383
    %431 = vmatpush1.msra.mxu0 %v382
    %432 = vmatprep.subr.mxu0 %v387
    %433 = vmatpush1.msra.mxu0 %v386
    %434 = vmatprep.subr.mxu0 %v391
    %435 = vmatpush1.msra.mxu0 %v390
    %436 = vmatprep.subr.mxu0 %v395
    %437 = vmatpush1.msra.mxu0 %v394
    %438 = vmatprep.subr.mxu0 %v399
    %439 = vmatpush1.msra.mxu0 %v398
    %440 = vmatprep.subr.mxu0 %v403
    %441 = vmatpush1.msra.mxu0 %v402
    %442 = vmatprep.subr.mxu0 %v407
    %443 = vmatpush1.msra.mxu0 %v406
    %444 = vmatprep.subr.mxu0 %v411
    %445 = vmatpush1.msra.mxu0 %v410
    %446 = vmatprep.subr.mxu0 0.0
    %447 = vmatpush1.msra.mxu0 0.0
    %448 = vmatprep.subr.mxu0 0.0
    %449 = vmatpush1.msra.mxu0 0.0
    %450 = vmatprep.subr.mxu0 0.0
    %451 = vmatpush1.msra.mxu0 0.0
    %452 = vmatprep.subr.mxu0 0.0
    %453 = vmatpush1.msra.mxu0 0.0
    %454 = vmatprep.subr.mxu0 0.0
    %455 = vmatpush1.msra.mxu0 0.0
    %456 = vmatprep.subr.mxu0 0.0
    %457 = vmatpush1.msra.mxu0 0.0
    %458 = vmatprep.subr.mxu0 0.0
    %459 = vmatpush1.msra.mxu0 0.0
    %460 = vmatprep.subr.mxu0 0.0
    %461 = vmatpush1.msra.mxu0 0.0
    %462 = vmatprep.subr.mxu0 0.0
    %463 = vmatpush1.msra.mxu0 0.0
    %464 = vmatprep.subr.mxu0 0.0
    %465 = vmatpush1.msra.mxu0 0.0
    %466 = vmatprep.subr.mxu0 0.0
    %467 = vmatpush1.msra.mxu0 0.0
    %468 = vmatprep.subr.mxu0 0.0
    %469 = vmatpush1.msra.mxu0 0.0
    %470 = vmatprep.subr.mxu0 0.0
    %471 = vmatpush1.msra.mxu0 0.0
    %472 = vmatprep.subr.mxu0 0.0
    %473 = vmatpush1.msra.mxu0 0.0
    %474 = vmatprep.subr.mxu0 0.0
    %475 = vmatpush1.msra.mxu0 0.0
    %476 = vmatprep.subr.mxu0 0.0
    %477 = vmatpush1.msra.mxu0 0.0
    %478 = vmatprep.mubr.f32.mxu0 0.0
    %479 = vmatmul.mubr.f32.gmra.mrb[0].mxu0 0.0
    %v480 = vpop.f32.mrb[0].mxu0
    %v481 = vadd.f32 0.0, %v480
    %v482 = vpop.f32.mrb[0].mxu0
    %v483 = vadd.f32 0.0, %v482
    %484 = vdwg.mxu0
    %485 = vmatprep.subr.mxu0 %v353
    %486 = vmatpush1.msra.mxu0 %v352
    %487 = vmatprep.subr.mxu0 %v357
    %488 = vmatpush1.msra.mxu0 %v356
    %489 = vmatprep.subr.mxu0 %v361
    %490 = vmatpush1.msra.mxu0 %v360
    %491 = vmatprep.subr.mxu0 %v365
    %492 = vmatpush1.msra.mxu0 %v364
    %493 = vmatprep.subr.mxu0 %v369
    %494 = vmatpush1.msra.mxu0 %v368
    %495 = vmatprep.subr.mxu0 %v373
    %496 = vmatpush1.msra.mxu0 %v372
    %497 = vmatprep.subr.mxu0 %v377
    %498 = vmatpush1.msra.mxu0 %v376
    %499 = vmatprep.subr.mxu0 %v381
    %500 = vmatpush1.msra.mxu0 %v380
    %501 = vmatprep.subr.mxu0 %v385
    %502 = vmatpush1.msra.mxu0 %v384
    %503 = vmatprep.subr.mxu0 %v389
    %504 = vmatpush1.msra.mxu0 %v388
    %505 = vmatprep.subr.mxu0 %v393
    %506 = vmatpush1.msra.mxu0 %v392
    %507 = vmatprep.subr.mxu0 %v397
    %508 = vmatpush1.msra.mxu0 %v396
    %509 = vmatprep.subr.mxu0 %v401
    %510 = vmatpush1.msra.mxu0 %v400
    %511 = vmatprep.subr.mxu0 %v405
    %512 = vmatpush1.msra.mxu0 %v404
    %513 = vmatprep.subr.mxu0 %v409
    %514 = vmatpush1.msra.mxu0 %v408
    %515 = vmatprep.subr.mxu0 %v413
    %516 = vmatpush1.msra.mxu0 %v412
    %517 = vmatprep.subr.mxu0 0.0
    %518 = vmatpush1.msra.mxu0 0.0
    %519 = vmatprep.subr.mxu0 0.0
    %520 = vmatpush1.msra.mxu0 0.0
    %521 = vmatprep.subr.mxu0 0.0
    %522 = vmatpush1.msra.mxu0 0.0
    %523 = vmatprep.subr.mxu0 0.0
    %524 = vmatpush1.msra.mxu0 0.0
    %525 = vmatprep.subr.mxu0 0.0
    %526 = vmatpush1.msra.mxu0 0.0
    %527 = vmatprep.subr.mxu0 0.0
    %528 = vmatpush1.msra.mxu0 0.0
    %529 = vmatprep.subr.mxu0 0.0
    %530 = vmatpush1.msra.mxu0 0.0
    %531 = vmatprep.subr.mxu0 0.0
    %532 = vmatpush1.msra.mxu0 0.0
    %533 = vmatprep.subr.mxu0 0.0
    %534 = vmatpush1.msra.mxu0 0.0
    %535 = vmatprep.subr.mxu0 0.0
    %536 = vmatpush1.msra.mxu0 0.0
    %537 = vmatprep.subr.mxu0 0.0
    %538 = vmatpush1.msra.mxu0 0.0
    %539 = vmatprep.subr.mxu0 0.0
    %540 = vmatpush1.msra.mxu0 0.0
    %541 = vmatprep.subr.mxu0 0.0
    %542 = vmatpush1.msra.mxu0 0.0
    %543 = vmatprep.subr.mxu0 0.0
    %544 = vmatpush1.msra.mxu0 0.0
    %545 = vmatprep.subr.mxu0 0.0
    %546 = vmatpush1.msra.mxu0 0.0
    %547 = vmatprep.subr.mxu0 0.0
    %548 = vmatpush1.msra.mxu0 0.0
    %549 = vmatprep.mubr.f32.mxu0 0.0
    %550 = vmatmul.mubr.f32.gmra.mrb[0].mxu0 0.0
    %v551 = vpop.f32.mrb[0].mxu0
    %v552 = vadd.f32 0.0, %v551
    %v553 = vpop.f32.mrb[0].mxu0
    %v554 = vadd.f32 0.0, %v553
    %555 = vdwg.mxu0
    %v556 = vadd.f32 %v191, %v481
    %v557 = vadd.f32 %v193, %v483
    %v558 = vadd.f32 %v304, %v552
    %v559 = vadd.f32 %v306, %v554
    %v560 = vmul.f32 %v556, 0.5
    %v561 = vmul.f32 %v557, 0.5
    %v562 = vmul.f32 %v558, 0.5
    %v563 = vtanh.pop %v560
    %v564 = vtanh.pop %v561
    %v565 = vtanh.pop %v562
    %v566 = vadd.f32 %v563, 1.0
    %v567 = vadd.f32 %v564, 1.0
    %v568 = vadd.f32 %v565, 1.0
    %v569 = vmul.f32 %v566, 0.5
    %v570 = vmul.f32 %v567, 0.5
    %v571 = vmul.f32 %v568, 0.5
    %v572 = vtanh.pop %v559
    %v573 = vmul.f32 %v570, 0.0
    %v574 = vmul.f32 %v569, %v572
    %v575 = vadd.f32 %v573, %v574
    %v576 = vtanh.pop %v575
    %v577 = vmul.f32 %v571, %v576
    %578 = vst [vmem:[#allocation2] sm:$0xff] %v577
    %579 = vmatprep.subr.mxu0 %v351
    %580 = vmatpush1.msra.mxu0 %v350
    %581 = vmatprep.subr.mxu0 %v355
    %582 = vmatpush1.msra.mxu0 %v354
    %583 = vmatprep.subr.mxu0 %v359
    %584 = vmatpush1.msra.mxu0 %v358
    %585 = vmatprep.subr.mxu0 %v363
    %586 = vmatpush1.msra.mxu0 %v362
    %587 = vmatprep.subr.mxu0 %v367
    %588 = vmatpush1.msra.mxu0 %v366
    %589 = vmatprep.subr.mxu0 %v371
    %590 = vmatpush1.msra.mxu0 %v370
    %591 = vmatprep.subr.mxu0 %v375
    %592 = vmatpush1.msra.mxu0 %v374
    %593 = vmatprep.subr.mxu0 %v379
    %594 = vmatpush1.msra.mxu0 %v378
    %595 = vmatprep.subr.mxu0 %v383
    %596 = vmatpush1.msra.mxu0 %v382
    %597 = vmatprep.subr.mxu0 %v387
    %598 = vmatpush1.msra.mxu0 %v386
    %599 = vmatprep.subr.mxu0 %v391
    %600 = vmatpush1.msra.mxu0 %v390
    %601 = vmatprep.subr.mxu0 %v395
    %602 = vmatpush1.msra.mxu0 %v394
    %603 = vmatprep.subr.mxu0 %v399
    %604 = vmatpush1.msra.mxu0 %v398
    %605 = vmatprep.subr.mxu0 %v403
    %606 = vmatpush1.msra.mxu0 %v402
    %607 = vmatprep.subr.mxu0 %v407
    %608 = vmatpush1.msra.mxu0 %v406
    %609 = vmatprep.subr.mxu0 %v411
    %610 = vmatpush1.msra.mxu0 %v410
    %611 = vmatprep.subr.mxu0 0.0
    %612 = vmatpush1.msra.mxu0 0.0
    %613 = vmatprep.subr.mxu0 0.0
    %614 = vmatpush1.msra.mxu0 0.0
    %615 = vmatprep.subr.mxu0 0.0
    %616 = vmatpush1.msra.mxu0 0.0
    %617 = vmatprep.subr.mxu0 0.0
    %618 = vmatpush1.msra.mxu0 0.0
    %619 = vmatprep.subr.mxu0 0.0
    %620 = vmatpush1.msra.mxu0 0.0
    %621 = vmatprep.subr.mxu0 0.0
    %622 = vmatpush1.msra.mxu0 0.0
    %623 = vmatprep.subr.mxu0 0.0
    %624 = vmatpush1.msra.mxu0 0.0
    %625 = vmatprep.subr.mxu0 0.0
    %626 = vmatpush1.msra.mxu0 0.0
    %627 = vmatprep.subr.mxu0 0.0
    %628 = vmatpush1.msra.mxu0 0.0
    %629 = vmatprep.subr.mxu0 0.0
    %630 = vmatpush1.msra.mxu0 0.0
    %631 = vmatprep.subr.mxu0 0.0
    %632 = vmatpush1.msra.mxu0 0.0
    %633 = vmatprep.subr.mxu0 0.0
    %634 = vmatpush1.msra.mxu0 0.0
    %635 = vmatprep.subr.mxu0 0.0
    %636 = vmatpush1.msra.mxu0 0.0
    %637 = vmatprep.subr.mxu0 0.0
    %638 = vmatpush1.msra.mxu0 0.0
    %639 = vmatprep.subr.mxu0 0.0
    %640 = vmatpush1.msra.mxu0 0.0
    %641 = vmatprep.subr.mxu0 0.0
    %642 = vmatpush1.msra.mxu0 0.0
    %643 = vmatprep.mubr.f32.mxu0 0.0
    %644 = vmatmul.mubr.f32.gmra.mrb[0].mxu0 %v577
    %v645 = vpop.f32.mrb[0].mxu0
    %v646 = vadd.f32 0.0, %v645
    %v647 = vpop.f32.mrb[0].mxu0
    %v648 = vadd.f32 0.0, %v647
    %649 = vdwg.mxu0
    %650 = vmatprep.subr.mxu0 %v353
    %651 = vmatpush1.msra.mxu0 %v352
    %652 = vmatprep.subr.mxu0 %v357
    %653 = vmatpush1.msra.mxu0 %v356
    %654 = vmatprep.subr.mxu0 %v361
    %655 = vmatpush1.msra.mxu0 %v360
    %656 = vmatprep.subr.mxu0 %v365
    %657 = vmatpush1.msra.mxu0 %v364
    %658 = vmatprep.subr.mxu0 %v369
    %659 = vmatpush1.msra.mxu0 %v368
    %660 = vmatprep.subr.mxu0 %v373
    %661 = vmatpush1.msra.mxu0 %v372
    %662 = vmatprep.subr.mxu0 %v377
    %663 = vmatpush1.msra.mxu0 %v376
    %664 = vmatprep.subr.mxu0 %v381
    %665 = vmatpush1.msra.mxu0 %v380
    %666 = vmatprep.subr.mxu0 %v385
    %667 = vmatpush1.msra.mxu0 %v384
    %668 = vmatprep.subr.mxu0 %v389
    %669 = vmatpush1.msra.mxu0 %v388
    %670 = vmatprep.subr.mxu0 %v393
    %671 = vmatpush1.msra.mxu0 %v392
    %672 = vmatprep.subr.mxu0 %v397
    %673 = vmatpush1.msra.mxu0 %v396
    %674 = vmatprep.subr.mxu0 %v401
    %675 = vmatpush1.msra.mxu0 %v400
    %676 = vmatprep.subr.mxu0 %v405
    %677 = vmatpush1.msra.mxu0 %v404
    %678 = vmatprep.subr.mxu0 %v409
    %679 = vmatpush1.msra.mxu0 %v408
    %680 = vmatprep.subr.mxu0 %v413
    %681 = vmatpush1.msra.mxu0 %v412
    %682 = vmatprep.subr.mxu0 0.0
    %683 = vmatpush1.msra.mxu0 0.0
    %684 = vmatprep.subr.mxu0 0.0
    %685 = vmatpush1.msra.mxu0 0.0
    %686 = vmatprep.subr.mxu0 0.0
    %687 = vmatpush1.msra.mxu0 0.0
    %688 = vmatprep.subr.mxu0 0.0
    %689 = vmatpush1.msra.mxu0 0.0
    %690 = vmatprep.subr.mxu0 0.0
    %691 = vmatpush1.msra.mxu0 0.0
    %692 = vmatprep.subr.mxu0 0.0
    %693 = vmatpush1.msra.mxu0 0.0
    %694 = vmatprep.subr.mxu0 0.0
    %695 = vmatpush1.msra.mxu0 0.0
    %696 = vmatprep.subr.mxu0 0.0
    %697 = vmatpush1.msra.mxu0 0.0
    %698 = vmatprep.subr.mxu0 0.0
    %699 = vmatpush1.msra.mxu0 0.0
    %700 = vmatprep.subr.mxu0 0.0
    %701 = vmatpush1.msra.mxu0 0.0
    %702 = vmatprep.subr.mxu0 0.0
    %703 = vmatpush1.msra.mxu0 0.0
    %704 = vmatprep.subr.mxu0 0.0
    %705 = vmatpush1.msra.mxu0 0.0
    %706 = vmatprep.subr.mxu0 0.0
    %707 = vmatpush1.msra.mxu0 0.0
    %708 = vmatprep.subr.mxu0 0.0
    %709 = vmatpush1.msra.mxu0 0.0
    %710 = vmatprep.subr.mxu0 0.0
    %711 = vmatpush1.msra.mxu0 0.0
    %712 = vmatprep.subr.mxu0 0.0
    %713 = vmatpush1.msra.mxu0 0.0
    %714 = vmatprep.mubr.f32.mxu0 0.0
    %715 = vmatmul.mubr.f32.gmra.mrb[0].mxu0 %v577
    %v716 = vpop.f32.mrb[0].mxu0
    %v717 = vadd.f32 0.0, %v716
    %v718 = vpop.f32.mrb[0].mxu0
    %v719 = vadd.f32 0.0, %v718
    %720 = vdwg.mxu0
    %v721 = vadd.f32 %v197, %v646
    %v722 = vadd.f32 %v199, %v648
    %v723 = vadd.f32 %v310, %v717
    %v724 = vadd.f32 %v312, %v719
    %v725 = vmul.f32 %v721, 0.5
    %v726 = vmul.f32 %v722, 0.5
    %v727 = vmul.f32 %v723, 0.5
    %v728 = vtanh.pop %v725
    %v729 = vtanh.pop %v726
    %v730 = vtanh.pop %v727
    %v731 = vadd.f32 %v728, 1.0
    %v732 = vadd.f32 %v729, 1.0
    %v733 = vadd.f32 %v730, 1.0
    %v734 = vmul.f32 %v731, 0.5
    %v735 = vmul.f32 %v732, 0.5
    %v736 = vmul.f32 %v733, 0.5
    %v737 = vtanh.pop %v724
    %v738 = vmul.f32 %v735, %v575
    %v739 = vmul.f32 %v734, %v737
    %v740 = vadd.f32 %v738, %v739
    %v741 = vtanh.pop %v740
    %v742 = vmul.f32 %v736, %v741
    %743 = vst [vmem:[#allocation2 + $0x8] sm:$0xff] %v742
    %744 = vmatprep.subr.mxu0 %v351
    %745 = vmatpush1.msra.mxu0 %v350
    %746 = vmatprep.subr.mxu0 %v355
    %747 = vmatpush1.msra.mxu0 %v354
    %748 = vmatprep.subr.mxu0 %v359
    %749 = vmatpush1.msra.mxu0 %v358
    %750 = vmatprep.subr.mxu0 %v363
    %751 = vmatpush1.msra.mxu0 %v362
    %752 = vmatprep.subr.mxu0 %v367
    %753 = vmatpush1.msra.mxu0 %v366
    %754 = vmatprep.subr.mxu0 %v371
    %755 = vmatpush1.msra.mxu0 %v370
    %756 = vmatprep.subr.mxu0 %v375
    %757 = vmatpush1.msra.mxu0 %v374
    %758 = vmatprep.subr.mxu0 %v379
    %759 = vmatpush1.msra.mxu0 %v378
    %760 = vmatprep.subr.mxu0 %v383
    %761 = vmatpush1.msra.mxu0 %v382
    %762 = vmatprep.subr.mxu0 %v387
    %763 = vmatpush1.msra.mxu0 %v386
    %764 = vmatprep.subr.mxu0 %v391
    %765 = vmatpush1.msra.mxu0 %v390
    %766 = vmatprep.subr.mxu0 %v395
    %767 = vmatpush1.msra.mxu0 %v394
    %768 = vmatprep.subr.mxu0 %v399
    %769 = vmatpush1.msra.mxu0 %v398
    %770 = vmatprep.subr.mxu0 %v403
    %771 = vmatpush1.msra.mxu0 %v402
    %772 = vmatprep.subr.mxu0 %v407
    %773 = vmatpush1.msra.mxu0 %v406
    %774 = vmatprep.subr.mxu0 %v411
    %775 = vmatpush1.msra.mxu0 %v410
    %776 = vmatprep.subr.mxu0 0.0
    %777 = vmatpush1.msra.mxu0 0.0
    %778 = vmatprep.subr.mxu0 0.0
    %779 = vmatpush1.msra.mxu0 0.0
    %780 = vmatprep.subr.mxu0 0.0
    %781 = vmatpush1.msra.mxu0 0.0
    %782 = vmatprep.subr.mxu0 0.0
    %783 = vmatpush1.msra.mxu0 0.0
    %784 = vmatprep.subr.mxu0 0.0
    %785 = vmatpush1.msra.mxu0 0.0
    %786 = vmatprep.subr.mxu0 0.0
    %787 = vmatpush1.msra.mxu0 0.0
    %788 = vmatprep.subr.mxu0 0.0
    %789 = vmatpush1.msra.mxu0 0.0
    %790 = vmatprep.subr.mxu0 0.0
    %791 = vmatpush1.msra.mxu0 0.0
    %792 = vmatprep.subr.mxu0 0.0
    %793 = vmatpush1.msra.mxu0 0.0
    %794 = vmatprep.subr.mxu0 0.0
    %795 = vmatpush1.msra.mxu0 0.0
    %796 = vmatprep.subr.mxu0 0.0
    %797 = vmatpush1.msra.mxu0 0.0
    %798 = vmatprep.subr.mxu0 0.0
    %799 = vmatpush1.msra.mxu0 0.0
    %800 = vmatprep.subr.mxu0 0.0
    %801 = vmatpush1.msra.mxu0 0.0
    %802 = vmatprep.subr.mxu0 0.0
    %803 = vmatpush1.msra.mxu0 0.0
    %804 = vmatprep.subr.mxu0 0.0
    %805 = vmatpush1.msra.mxu0 0.0
    %806 = vmatprep.subr.mxu0 0.0
    %807 = vmatpush1.msra.mxu0 0.0
    %808 = vmatprep.mubr.f32.mxu0 0.0
    %809 = vmatmul.mubr.f32.gmra.mrb[0].mxu0 %v742
    %v810 = vpop.f32.mrb[0].mxu0
    %v811 = vadd.f32 0.0, %v810
    %v812 = vpop.f32.mrb[0].mxu0
    %v813 = vadd.f32 0.0, %v812
    %814 = vdwg.mxu0
    %815 = vmatprep.subr.mxu0 %v353
    %816 = vmatpush1.msra.mxu0 %v352
    %817 = vmatprep.subr.mxu0 %v357
    %818 = vmatpush1.msra.mxu0 %v356
    %819 = vmatprep.subr.mxu0 %v361
    %820 = vmatpush1.msra.mxu0 %v360
    %821 = vmatprep.subr.mxu0 %v365
    %822 = vmatpush1.msra.mxu0 %v364
    %823 = vmatprep.subr.mxu0 %v369
    %824 = vmatpush1.msra.mxu0 %v368
    %825 = vmatprep.subr.mxu0 %v373
    %826 = vmatpush1.msra.mxu0 %v372
    %827 = vmatprep.subr.mxu0 %v377
    %828 = vmatpush1.msra.mxu0 %v376
    %829 = vmatprep.subr.mxu0 %v381
    %830 = vmatpush1.msra.mxu0 %v380
    %831 = vmatprep.subr.mxu0 %v385
    %832 = vmatpush1.msra.mxu0 %v384
    %833 = vmatprep.subr.mxu0 %v389
    %834 = vmatpush1.msra.mxu0 %v388
    %835 = vmatprep.subr.mxu0 %v393
    %836 = vmatpush1.msra.mxu0 %v392
    %837 = vmatprep.subr.mxu0 %v397
    %838 = vmatpush1.msra.mxu0 %v396
    %839 = vmatprep.subr.mxu0 %v401
    %840 = vmatpush1.msra.mxu0 %v400
    %841 = vmatprep.subr.mxu0 %v405
    %842 = vmatpush1.msra.mxu0 %v404
    %843 = vmatprep.subr.mxu0 %v409
    %844 = vmatpush1.msra.mxu0 %v408
    %845 = vmatprep.subr.mxu0 %v413
    %846 = vmatpush1.msra.mxu0 %v412
    %847 = vmatprep.subr.mxu0 0.0
    %848 = vmatpush1.msra.mxu0 0.0
    %849 = vmatprep.subr.mxu0 0.0
    %850 = vmatpush1.msra.mxu0 0.0
    %851 = vmatprep.subr.mxu0 0.0
    %852 = vmatpush1.msra.mxu0 0.0
    %853 = vmatprep.subr.mxu0 0.0
    %854 = vmatpush1.msra.mxu0 0.0
    %855 = vmatprep.subr.mxu0 0.0
    %856 = vmatpush1.msra.mxu0 0.0
    %857 = vmatprep.subr.mxu0 0.0
    %858 = vmatpush1.msra.mxu0 0.0
    %859 = vmatprep.subr.mxu0 0.0
    %860 = vmatpush1.msra.mxu0 0.0
    %861 = vmatprep.subr.mxu0 0.0
    %862 = vmatpush1.msra.mxu0 0.0
    %863 = vmatprep.subr.mxu0 0.0
    %864 = vmatpush1.msra.mxu0 0.0
    %865 = vmatprep.subr.mxu0 0.0
    %866 = vmatpush1.msra.mxu0 0.0
    %867 = vmatprep.subr.mxu0 0.0
    %868 = vmatpush1.msra.mxu0 0.0
    %869 = vmatprep.subr.mxu0 0.0
    %870 = vmatpush1.msra.mxu0 0.0
    %871 = vmatprep.subr.mxu0 0.0
    %872 = vmatpush1.msra.mxu0 0.0
    %873 = vmatprep.subr.mxu0 0.0
    %874 = vmatpush1.msra.mxu0 0.0
    %875 = vmatprep.subr.mxu0 0.0
    %876 = vmatpush1.msra.mxu0 0.0
    %877 = vmatprep.subr.mxu0 0.0
    %878 = vmatpush1.msra.mxu0 0.0
    %879 = vmatprep.mubr.f32.mxu0 0.0
    %880 = vmatmul.mubr.f32.gmra.mrb[0].mxu0 %v742
    %v881 = vpop.f32.mrb[0].mxu0
    %v882 = vadd.f32 0.0, %v881
    %v883 = vpop.f32.mrb[0].mxu0
    %v884 = vadd.f32 0.0, %v883
    %885 = vdwg.mxu0
    %v886 = vadd.f32 %v203, %v811
    %v887 = vadd.f32 %v205, %v813
    %v888 = vadd.f32 %v316, %v882
    %v889 = vadd.f32 %v318, %v884
    %v890 = vmul.f32 %v886, 0.5
    %v891 = vmul.f32 %v887, 0.5
    %v892 = vmul.f32 %v888, 0.5
    %v893 = vtanh.pop %v890
    %v894 = vtanh.pop %v891
    %v895 = vtanh.pop %v892
    %v896 = vadd.f32 %v893, 1.0
    %v897 = vadd.f32 %v894, 1.0
    %v898 = vadd.f32 %v895, 1.0
    %v899 = vmul.f32 %v896, 0.5
    %v900 = vmul.f32 %v897, 0.5
    %v901 = vmul.f32 %v898, 0.5
    %v902 = vtanh.pop %v889
    %v903 = vmul.f32 %v900, %v740
    %v904 = vmul.f32 %v899, %v902
    %v905 = vadd.f32 %v903, %v904
    %v906 = vtanh.pop %v905
    %v907 = vmul.f32 %v901, %v906
    %908 = vst [vmem:[#allocation2 + $0x10] sm:$0xff] %v907
    %909 = vmatprep.subr.mxu0 %v351
    %910 = vmatpush1.msra.mxu0 %v350
    %911 = vmatprep.subr.mxu0 %v355
    %912 = vmatpush1.msra.mxu0 %v354
    %913 = vmatprep.subr.mxu0 %v359
    %914 = vmatpush1.msra.mxu0 %v358
    %915 = vmatprep.subr.mxu0 %v363
    %916 = vmatpush1.msra.mxu0 %v362
    %917 = vmatprep.subr.mxu0 %v367
    %918 = vmatpush1.msra.mxu0 %v366
    %919 = vmatprep.subr.mxu0 %v371
    %920 = vmatpush1.msra.mxu0 %v370
    %921 = vmatprep.subr.mxu0 %v375
    %922 = vmatpush1.msra.mxu0 %v374
    %923 = vmatprep.subr.mxu0 %v379
    %924 = vmatpush1.msra.mxu0 %v378
    %925 = vmatprep.subr.mxu0 %v383
    %926 = vmatpush1.msra.mxu0 %v382
    %927 = vmatprep.subr.mxu0 %v387
    %928 = vmatpush1.msra.mxu0 %v386
    %929 = vmatprep.subr.mxu0 %v391
    %930 = vmatpush1.msra.mxu0 %v390
    %931 = vmatprep.subr.mxu0 %v395
    %932 = vmatpush1.msra.mxu0 %v394
    %933 = vmatprep.subr.mxu0 %v399
    %934 = vmatpush1.msra.mxu0 %v398
    %935 = vmatprep.subr.mxu0 %v403
    %936 = vmatpush1.msra.mxu0 %v402
    %937 = vmatprep.subr.mxu0 %v407
    %938 = vmatpush1.msra.mxu0 %v406
    %939 = vmatprep.subr.mxu0 %v411
    %940 = vmatpush1.msra.mxu0 %v410
    %941 = vmatprep.subr.mxu0 0.0
    %942 = vmatpush1.msra.mxu0 0.0
    %943 = vmatprep.subr.mxu0 0.0
    %944 = vmatpush1.msra.mxu0 0.0
    %945 = vmatprep.subr.mxu0 0.0
    %946 = vmatpush1.msra.mxu0 0.0
    %947 = vmatprep.subr.mxu0 0.0
    %948 = vmatpush1.msra.mxu0 0.0
    %949 = vmatprep.subr.mxu0 0.0
    %950 = vmatpush1.msra.mxu0 0.0
    %951 = vmatprep.subr.mxu0 0.0
    %952 = vmatpush1.msra.mxu0 0.0
    %953 = vmatprep.subr.mxu0 0.0
    %954 = vmatpush1.msra.mxu0 0.0
    %955 = vmatprep.subr.mxu0 0.0
    %956 = vmatpush1.msra.mxu0 0.0
    %957 = vmatprep.subr.mxu0 0.0
    %958 = vmatpush1.msra.mxu0 0.0
    %959 = vmatprep.subr.mxu0 0.0
    %960 = vmatpush1.msra.mxu0 0.0
    %961 = vmatprep.subr.mxu0 0.0
    %962 = vmatpush1.msra.mxu0 0.0
    %963 = vmatprep.subr.mxu0 0.0
    %964 = vmatpush1.msra.mxu0 0.0
    %965 = vmatprep.subr.mxu0 0.0
    %966 = vmatpush1.msra.mxu0 0.0
    %967 = vmatprep.subr.mxu0 0.0
    %968 = vmatpush1.msra.mxu0 0.0
    %969 = vmatprep.subr.mxu0 0.0
    %970 = vmatpush1.msra.mxu0 0.0
    %971 = vmatprep.subr.mxu0 0.0
    %972 = vmatpush1.msra.mxu0 0.0
    %973 = vmatprep.mubr.f32.mxu0 0.0
    %974 = vmatmul.mubr.f32.gmra.mrb[0].mxu0 %v907
    %v975 = vpop.f32.mrb[0].mxu0
    %v976 = vadd.f32 0.0, %v975
    %v977 = vpop.f32.mrb[0].mxu0
    %v978 = vadd.f32 0.0, %v977
    %979 = vdwg.mxu0
    %980 = vmatprep.subr.mxu0 %v353
    %981 = vmatpush1.msra.mxu0 %v352
    %982 = vmatprep.subr.mxu0 %v357
    %983 = vmatpush1.msra.mxu0 %v356
    %984 = vmatprep.subr.mxu0 %v361
    %985 = vmatpush1.msra.mxu0 %v360
    %986 = vmatprep.subr.mxu0 %v365
    %987 = vmatpush1.msra.mxu0 %v364
    %988 = vmatprep.subr.mxu0 %v369
    %989 = vmatpush1.msra.mxu0 %v368
    %990 = vmatprep.subr.mxu0 %v373
    %991 = vmatpush1.msra.mxu0 %v372
    %992 = vmatprep.subr.mxu0 %v377
    %993 = vmatpush1.msra.mxu0 %v376
    %994 = vmatprep.subr.mxu0 %v381
    %995 = vmatpush1.msra.mxu0 %v380
    %996 = vmatprep.subr.mxu0 %v385
    %997 = vmatpush1.msra.mxu0 %v384
    %998 = vmatprep.subr.mxu0 %v389
    %999 = vmatpush1.msra.mxu0 %v388
    %1000 = vmatprep.subr.mxu0 %v393
    %1001 = vmatpush1.msra.mxu0 %v392
    %1002 = vmatprep.subr.mxu0 %v397
    %1003 = vmatpush1.msra.mxu0 %v396
    %1004 = vmatprep.subr.mxu0 %v401
    %1005 = vmatpush1.msra.mxu0 %v400
    %1006 = vmatprep.subr.mxu0 %v405
    %1007 = vmatpush1.msra.mxu0 %v404
    %1008 = vmatprep.subr.mxu0 %v409
    %1009 = vmatpush1.msra.mxu0 %v408
    %1010 = vmatprep.subr.mxu0 %v413
    %1011 = vmatpush1.msra.mxu0 %v412
    %1012 = vmatprep.subr.mxu0 0.0
    %1013 = vmatpush1.msra.mxu0 0.0
    %1014 = vmatprep.subr.mxu0 0.0
    %1015 = vmatpush1.msra.mxu0 0.0
    %1016 = vmatprep.subr.mxu0 0.0
    %1017 = vmatpush1.msra.mxu0 0.0
    %1018 = vmatprep.subr.mxu0 0.0
    %1019 = vmatpush1.msra.mxu0 0.0
    %1020 = vmatprep.subr.mxu0 0.0
    %1021 = vmatpush1.msra.mxu0 0.0
    %1022 = vmatprep.subr.mxu0 0.0
    %1023 = vmatpush1.msra.mxu0 0.0
    %1024 = vmatprep.subr.mxu0 0.0
    %1025 = vmatpush1.msra.mxu0 0.0
    %1026 = vmatprep.subr.mxu0 0.0
    %1027 = vmatpush1.msra.mxu0 0.0
    %1028 = vmatprep.subr.mxu0 0.0
    %1029 = vmatpush1.msra.mxu0 0.0
    %1030 = vmatprep.subr.mxu0 0.0
    %1031 = vmatpush1.msra.mxu0 0.0
    %1032 = vmatprep.subr.mxu0 0.0
    %1033 = vmatpush1.msra.mxu0 0.0
    %1034 = vmatprep.subr.mxu0 0.0
    %1035 = vmatpush1.msra.mxu0 0.0
    %1036 = vmatprep.subr.mxu0 0.0
    %1037 = vmatpush1.msra.mxu0 0.0
    %1038 = vmatprep.subr.mxu0 0.0
    %1039 = vmatpush1.msra.mxu0 0.0
    %1040 = vmatprep.subr.mxu0 0.0
    %1041 = vmatpush1.msra.mxu0 0.0
    %1042 = vmatprep.subr.mxu0 0.0
    %1043 = vmatpush1.msra.mxu0 0.0
    %1044 = vmatprep.mubr.f32.mxu0 0.0
    %1045 = vmatmul.mubr.f32.gmra.mrb[0].mxu0 %v907
    %v1046 = vpop.f32.mrb[0].mxu0
    %v1047 = vadd.f32 0.0, %v1046
    %v1048 = vpop.f32.mrb[0].mxu0
    %v1049 = vadd.f32 0.0, %v1048
    %1050 = vdwg.mxu0
    %v1051 = vadd.f32 %v209, %v976
    %v1052 = vadd.f32 %v211, %v978
    %v1053 = vadd.f32 %v322, %v1047
    %v1054 = vadd.f32 %v324, %v1049
    %v1055 = vmul.f32 %v1051, 0.5
    %v1056 = vmul.f32 %v1052, 0.5
    %v1057 = vmul.f32 %v1053, 0.5
    %v1058 = vtanh.pop %v1055
    %v1059 = vtanh.pop %v1056
    %v1060 = vtanh.pop %v1057
    %v1061 = vadd.f32 %v1058, 1.0
    %v1062 = vadd.f32 %v1059, 1.0
    %v1063 = vadd.f32 %v1060, 1.0
    %v1064 = vmul.f32 %v1061, 0.5
    %v1065 = vmul.f32 %v1062, 0.5
    %v1066 = vmul.f32 %v1063, 0.5
    %v1067 = vtanh.pop %v1054
    %v1068 = vmul.f32 %v1065, %v905
    %v1069 = vmul.f32 %v1064, %v1067
    %v1070 = vadd.f32 %v1068, %v1069
    %v1071 = vtanh.pop %v1070
    %v1072 = vmul.f32 %v1066, %v1071
    %1073 = vst [vmem:[#allocation2 + $0x18] sm:$0xff] %v1072
    %1074 = vmatprep.subr.mxu0 %v351
    %1075 = vmatpush1.msra.mxu0 %v350
    %1076 = vmatprep.subr.mxu0 %v355
    %1077 = vmatpush1.msra.mxu0 %v354
    %1078 = vmatprep.subr.mxu0 %v359
    %1079 = vmatpush1.msra.mxu0 %v358
    %1080 = vmatprep.subr.mxu0 %v363
    %1081 = vmatpush1.msra.mxu0 %v362
    %1082 = vmatprep.subr.mxu0 %v367
    %1083 = vmatpush1.msra.mxu0 %v366
    %1084 = vmatprep.subr.mxu0 %v371
    %1085 = vmatpush1.msra.mxu0 %v370
    %1086 = vmatprep.subr.mxu0 %v375
    %1087 = vmatpush1.msra.mxu0 %v374
    %1088 = vmatprep.subr.mxu0 %v379
    %1089 = vmatpush1.msra.mxu0 %v378
    %1090 = vmatprep.subr.mxu0 %v383
    %1091 = vmatpush1.msra.mxu0 %v382
    %1092 = vmatprep.subr.mxu0 %v387
    %1093 = vmatpush1.msra.mxu0 %v386
    %1094 = vmatprep.subr.mxu0 %v391
    %1095 = vmatpush1.msra.mxu0 %v390
    %1096 = vmatprep.subr.mxu0 %v395
    %1097 = vmatpush1.msra.mxu0 %v394
    %1098 = vmatprep.subr.mxu0 %v399
    %1099 = vmatpush1.msra.mxu0 %v398
    %1100 = vmatprep.subr.mxu0 %v403
    %1101 = vmatpush1.msra.mxu0 %v402
    %1102 = vmatprep.subr.mxu0 %v407
    %1103 = vmatpush1.msra.mxu0 %v406
    %1104 = vmatprep.subr.mxu0 %v411
    %1105 = vmatpush1.msra.mxu0 %v410
    %1106 = vmatprep.subr.mxu0 0.0
    %1107 = vmatpush1.msra.mxu0 0.0
    %1108 = vmatprep.subr.mxu0 0.0
    %1109 = vmatpush1.msra.mxu0 0.0
    %1110 = vmatprep.subr.mxu0 0.0
    %1111 = vmatpush1.msra.mxu0 0.0
    %1112 = vmatprep.subr.mxu0 0.0
    %1113 = vmatpush1.msra.mxu0 0.0
    %1114 = vmatprep.subr.mxu0 0.0
    %1115 = vmatpush1.msra.mxu0 0.0
    %1116 = vmatprep.subr.mxu0 0.0
    %1117 = vmatpush1.msra.mxu0 0.0
    %1118 = vmatprep.subr.mxu0 0.0
    %1119 = vmatpush1.msra.mxu0 0.0
    %1120 = vmatprep.subr.mxu0 0.0
    %1121 = vmatpush1.msra.mxu0 0.0
    %1122 = vmatprep.subr.mxu0 0.0
    %1123 = vmatpush1.msra.mxu0 0.0
    %1124 = vmatprep.subr.mxu0 0.0
    %1125 = vmatpush1.msra.mxu0 0.0
    %1126 = vmatprep.subr.mxu0 0.0
    %1127 = vmatpush1.msra.mxu0 0.0
    %1128 = vmatprep.subr.mxu0 0.0
    %1129 = vmatpush1.msra.mxu0 0.0
    %1130 = vmatprep.subr.mxu0 0.0
    %1131 = vmatpush1.msra.mxu0 0.0
    %1132 = vmatprep.subr.mxu0 0.0
    %1133 = vmatpush1.msra.mxu0 0.0
    %1134 = vmatprep.subr.mxu0 0.0
    %1135 = vmatpush1.msra.mxu0 0.0
    %1136 = vmatprep.subr.mxu0 0.0
    %1137 = vmatpush1.msra.mxu0 0.0
    %1138 = vmatprep.mubr.f32.mxu0 0.0
    %1139 = vmatmul.mubr.f32.gmra.mrb[0].mxu0 %v1072
    %v1140 = vpop.f32.mrb[0].mxu0
    %v1141 = vadd.f32 0.0, %v1140
    %v1142 = vpop.f32.mrb[0].mxu0
    %v1143 = vadd.f32 0.0, %v1142
    %1144 = vdwg.mxu0
    %1145 = vmatprep.subr.mxu0 %v353
    %1146 = vmatpush1.msra.mxu0 %v352
    %1147 = vmatprep.subr.mxu0 %v357
    %1148 = vmatpush1.msra.mxu0 %v356
    %1149 = vmatprep.subr.mxu0 %v361
    %1150 = vmatpush1.msra.mxu0 %v360
    %1151 = vmatprep.subr.mxu0 %v365
    %1152 = vmatpush1.msra.mxu0 %v364
    %1153 = vmatprep.subr.mxu0 %v369
    %1154 = vmatpush1.msra.mxu0 %v368
    %1155 = vmatprep.subr.mxu0 %v373
    %1156 = vmatpush1.msra.mxu0 %v372
    %1157 = vmatprep.subr.mxu0 %v377
    %1158 = vmatpush1.msra.mxu0 %v376
    %1159 = vmatprep.subr.mxu0 %v381
    %1160 = vmatpush1.msra.mxu0 %v380
    %1161 = vmatprep.subr.mxu0 %v385
    %1162 = vmatpush1.msra.mxu0 %v384
    %1163 = vmatprep.subr.mxu0 %v389
    %1164 = vmatpush1.msra.mxu0 %v388
    %1165 = vmatprep.subr.mxu0 %v393
    %1166 = vmatpush1.msra.mxu0 %v392
    %1167 = vmatprep.subr.mxu0 %v397
    %1168 = vmatpush1.msra.mxu0 %v396
    %1169 = vmatprep.subr.mxu0 %v401
    %1170 = vmatpush1.msra.mxu0 %v400
    %1171 = vmatprep.subr.mxu0 %v405
    %1172 = vmatpush1.msra.mxu0 %v404
    %1173 = vmatprep.subr.mxu0 %v409
    %1174 = vmatpush1.msra.mxu0 %v408
    %1175 = vmatprep.subr.mxu0 %v413
    %1176 = vmatpush1.msra.mxu0 %v412
    %1177 = vmatprep.subr.mxu0 0.0
    %1178 = vmatpush1.msra.mxu0 0.0
    %1179 = vmatprep.subr.mxu0 0.0
    %1180 = vmatpush1.msra.mxu0 0.0
    %1181 = vmatprep.subr.mxu0 0.0
    %1182 = vmatpush1.msra.mxu0 0.0
    %1183 = vmatprep.subr.mxu0 0.0
    %1184 = vmatpush1.msra.mxu0 0.0
    %1185 = vmatprep.subr.mxu0 0.0
    %1186 = vmatpush1.msra.mxu0 0.0
    %1187 = vmatprep.subr.mxu0 0.0
    %1188 = vmatpush1.msra.mxu0 0.0
    %1189 = vmatprep.subr.mxu0 0.0
    %1190 = vmatpush1.msra.mxu0 0.0
    %1191 = vmatprep.subr.mxu0 0.0
    %1192 = vmatpush1.msra.mxu0 0.0
    %1193 = vmatprep.subr.mxu0 0.0
    %1194 = vmatpush1.msra.mxu0 0.0
    %1195 = vmatprep.subr.mxu0 0.0
    %1196 = vmatpush1.msra.mxu0 0.0
    %1197 = vmatprep.subr.mxu0 0.0
    %1198 = vmatpush1.msra.mxu0 0.0
    %1199 = vmatprep.subr.mxu0 0.0
    %1200 = vmatpush1.msra.mxu0 0.0
    %1201 = vmatprep.subr.mxu0 0.0
    %1202 = vmatpush1.msra.mxu0 0.0
    %1203 = vmatprep.subr.mxu0 0.0
    %1204 = vmatpush1.msra.mxu0 0.0
    %1205 = vmatprep.subr.mxu0 0.0
    %1206 = vmatpush1.msra.mxu0 0.0
    %1207 = vmatprep.subr.mxu0 0.0
    %1208 = vmatpush1.msra.mxu0 0.0
    %1209 = vmatprep.mubr.f32.mxu0 0.0
    %1210 = vmatmul.mubr.f32.gmra.mrb[0].mxu0 %v1072
    %v1211 = vpop.f32.mrb[0].mxu0
    %v1212 = vadd.f32 0.0, %v1211
    %v1213 = vpop.f32.mrb[0].mxu0
    %v1214 = vadd.f32 0.0, %v1213
    %1215 = vdwg.mxu0
    %v1216 = vadd.f32 %v215, %v1141
    %v1217 = vadd.f32 %v217, %v1143
    %v1218 = vadd.f32 %v328, %v1212
    %v1219 = vadd.f32 %v330, %v1214
    %v1220 = vmul.f32 %v1216, 0.5
    %v1221 = vmul.f32 %v1217, 0.5
    %v1222 = vmul.f32 %v1218, 0.5
    %v1223 = vtanh.pop %v1220
    %v1224 = vtanh.pop %v1221
    %v1225 = vtanh.pop %v1222
    %v1226 = vadd.f32 %v1223, 1.0
    %v1227 = vadd.f32 %v1224, 1.0
    %v1228 = vadd.f32 %v1225, 1.0
    %v1229 = vmul.f32 %v1226, 0.5
    %v1230 = vmul.f32 %v1227, 0.5
    %v1231 = vmul.f32 %v1228, 0.5
    %v1232 = vtanh.pop %v1219
    %v1233 = vmul.f32 %v1230, %v1070
    %v1234 = vmul.f32 %v1229, %v1232
    %v1235 = vadd.f32 %v1233, %v1234
    %v1236 = vtanh.pop %v1235
    %v1237 = vmul.f32 %v1231, %v1236
    %1238 = vst [vmem:[#allocation2 + $0x20] sm:$0xff] %v1237
    %1239 = vmatprep.subr.mxu0 %v351
    %1240 = vmatpush1.msra.mxu0 %v350
    %1241 = vmatprep.subr.mxu0 %v355
    %1242 = vmatpush1.msra.mxu0 %v354
    %1243 = vmatprep.subr.mxu0 %v359
    %1244 = vmatpush1.msra.mxu0 %v358
    %1245 = vmatprep.subr.mxu0 %v363
    %1246 = vmatpush1.msra.mxu0 %v362
    %1247 = vmatprep.subr.mxu0 %v367
    %1248 = vmatpush1.msra.mxu0 %v366
    %1249 = vmatprep.subr.mxu0 %v371
    %1250 = vmatpush1.msra.mxu0 %v370
    %1251 = vmatprep.subr.mxu0 %v375
    %1252 = vmatpush1.msra.mxu0 %v374
    %1253 = vmatprep.subr.mxu0 %v379
    %1254 = vmatpush1.msra.mxu0 %v378
    %1255 = vmatprep.subr.mxu0 %v383
    %1256 = vmatpush1.msra.mxu0 %v382
    %1257 = vmatprep.subr.mxu0 %v387
    %1258 = vmatpush1.msra.mxu0 %v386
    %1259 = vmatprep.subr.mxu0 %v391
    %1260 = vmatpush1.msra.mxu0 %v390
    %1261 = vmatprep.subr.mxu0 %v395
    %1262 = vmatpush1.msra.mxu0 %v394
    %1263 = vmatprep.subr.mxu0 %v399
    %1264 = vmatpush1.msra.mxu0 %v398
    %1265 = vmatprep.subr.mxu0 %v403
    %1266 = vmatpush1.msra.mxu0 %v402
    %1267 = vmatprep.subr.mxu0 %v407
    %1268 = vmatpush1.msra.mxu0 %v406
    %1269 = vmatprep.subr.mxu0 %v411
    %1270 = vmatpush1.msra.mxu0 %v410
    %1271 = vmatprep.subr.mxu0 0.0
    %1272 = vmatpush1.msra.mxu0 0.0
    %1273 = vmatprep.subr.mxu0 0.0
    %1274 = vmatpush1.msra.mxu0 0.0
    %1275 = vmatprep.subr.mxu0 0.0
    %1276 = vmatpush1.msra.mxu0 0.0
    %1277 = vmatprep.subr.mxu0 0.0
    %1278 = vmatpush1.msra.mxu0 0.0
    %1279 = vmatprep.subr.mxu0 0.0
    %1280 = vmatpush1.msra.mxu0 0.0
    %1281 = vmatprep.subr.mxu0 0.0
    %1282 = vmatpush1.msra.mxu0 0.0
    %1283 = vmatprep.subr.mxu0 0.0
    %1284 = vmatpush1.msra.mxu0 0.0
    %1285 = vmatprep.subr.mxu0 0.0
    %1286 = vmatpush1.msra.mxu0 0.0
    %1287 = vmatprep.subr.mxu0 0.0
    %1288 = vmatpush1.msra.mxu0 0.0
    %1289 = vmatprep.subr.mxu0 0.0
    %1290 = vmatpush1.msra.mxu0 0.0
    %1291 = vmatprep.subr.mxu0 0.0
    %1292 = vmatpush1.msra.mxu0 0.0
    %1293 = vmatprep.subr.mxu0 0.0
    %1294 = vmatpush1.msra.mxu0 0.0
    %1295 = vmatprep.subr.mxu0 0.0
    %1296 = vmatpush1.msra.mxu0 0.0
    %1297 = vmatprep.subr.mxu0 0.0
    %1298 = vmatpush1.msra.mxu0 0.0
    %1299 = vmatprep.subr.mxu0 0.0
    %1300 = vmatpush1.msra.mxu0 0.0
    %1301 = vmatprep.subr.mxu0 0.0
    %1302 = vmatpush1.msra.mxu0 0.0
    %1303 = vmatprep.mubr.f32.mxu0 0.0
    %1304 = vmatmul.mubr.f32.gmra.mrb[0].mxu0 %v1237
    %v1305 = vpop.f32.mrb[0].mxu0
    %v1306 = vadd.f32 0.0, %v1305
    %v1307 = vpop.f32.mrb[0].mxu0
    %v1308 = vadd.f32 0.0, %v1307
    %1309 = vdwg.mxu0
    %1310 = vmatprep.subr.mxu0 %v353
    %1311 = vmatpush1.msra.mxu0 %v352
    %1312 = vmatprep.subr.mxu0 %v357
    %1313 = vmatpush1.msra.mxu0 %v356
    %1314 = vmatprep.subr.mxu0 %v361
    %1315 = vmatpush1.msra.mxu0 %v360
    %1316 = vmatprep.subr.mxu0 %v365
    %1317 = vmatpush1.msra.mxu0 %v364
    %1318 = vmatprep.subr.mxu0 %v369
    %1319 = vmatpush1.msra.mxu0 %v368
    %1320 = vmatprep.subr.mxu0 %v373
    %1321 = vmatpush1.msra.mxu0 %v372
    %1322 = vmatprep.subr.mxu0 %v377
    %1323 = vmatpush1.msra.mxu0 %v376
    %1324 = vmatprep.subr.mxu0 %v381
    %1325 = vmatpush1.msra.mxu0 %v380
    %1326 = vmatprep.subr.mxu0 %v385
    %1327 = vmatpush1.msra.mxu0 %v384
    %1328 = vmatprep.subr.mxu0 %v389
    %1329 = vmatpush1.msra.mxu0 %v388
    %1330 = vmatprep.subr.mxu0 %v393
    %1331 = vmatpush1.msra.mxu0 %v392
    %1332 = vmatprep.subr.mxu0 %v397
    %1333 = vmatpush1.msra.mxu0 %v396
    %1334 = vmatprep.subr.mxu0 %v401
    %1335 = vmatpush1.msra.mxu0 %v400
    %1336 = vmatprep.subr.mxu0 %v405
    %1337 = vmatpush1.msra.mxu0 %v404
    %1338 = vmatprep.subr.mxu0 %v409
    %1339 = vmatpush1.msra.mxu0 %v408
    %1340 = vmatprep.subr.mxu0 %v413
    %1341 = vmatpush1.msra.mxu0 %v412
    %1342 = vmatprep.subr.mxu0 0.0
    %1343 = vmatpush1.msra.mxu0 0.0
    %1344 = vmatprep.subr.mxu0 0.0
    %1345 = vmatpush1.msra.mxu0 0.0
    %1346 = vmatprep.subr.mxu0 0.0
    %1347 = vmatpush1.msra.mxu0 0.0
    %1348 = vmatprep.subr.mxu0 0.0
    %1349 = vmatpush1.msra.mxu0 0.0
    %1350 = vmatprep.subr.mxu0 0.0
    %1351 = vmatpush1.msra.mxu0 0.0
    %1352 = vmatprep.subr.mxu0 0.0
    %1353 = vmatpush1.msra.mxu0 0.0
    %1354 = vmatprep.subr.mxu0 0.0
    %1355 = vmatpush1.msra.mxu0 0.0
    %1356 = vmatprep.subr.mxu0 0.0
    %1357 = vmatpush1.msra.mxu0 0.0
    %1358 = vmatprep.subr.mxu0 0.0
    %1359 = vmatpush1.msra.mxu0 0.0
    %1360 = vmatprep.subr.mxu0 0.0
    %1361 = vmatpush1.msra.mxu0 0.0
    %1362 = vmatprep.subr.mxu0 0.0
    %1363 = vmatpush1.msra.mxu0 0.0
    %1364 = vmatprep.subr.mxu0 0.0
    %1365 = vmatpush1.msra.mxu0 0.0
    %1366 = vmatprep.subr.mxu0 0.0
    %1367 = vmatpush1.msra.mxu0 0.0
    %1368 = vmatprep.subr.mxu0 0.0
    %1369 = vmatpush1.msra.mxu0 0.0
    %1370 = vmatprep.subr.mxu0 0.0
    %1371 = vmatpush1.msra.mxu0 0.0
    %1372 = vmatprep.subr.mxu0 0.0
    %1373 = vmatpush1.msra.mxu0 0.0
    %1374 = vmatprep.mubr.f32.mxu0 0.0
    %1375 = vmatmul.mubr.f32.gmra.mrb[0].mxu0 %v1237
    %v1376 = vpop.f32.mrb[0].mxu0
    %v1377 = vadd.f32 0.0, %v1376
    %v1378 = vpop.f32.mrb[0].mxu0
    %v1379 = vadd.f32 0.0, %v1378
    %1380 = vdwg.mxu0
    %v1381 = vadd.f32 %v221, %v1306
    %v1382 = vadd.f32 %v223, %v1308
    %v1383 = vadd.f32 %v334, %v1377
    %v1384 = vadd.f32 %v336, %v1379
    %v1385 = vmul.f32 %v1381, 0.5
    %v1386 = vmul.f32 %v1382, 0.5
    %v1387 = vmul.f32 %v1383, 0.5
    %v1388 = vtanh.pop %v1385
    %v1389 = vtanh.pop %v1386
    %v1390 = vtanh.pop %v1387
    %v1391 = vadd.f32 %v1388, 1.0
    %v1392 = vadd.f32 %v1389, 1.0
    %v1393 = vadd.f32 %v1390, 1.0
    %v1394 = vmul.f32 %v1391, 0.5
    %v1395 = vmul.f32 %v1392, 0.5
    %v1396 = vmul.f32 %v1393, 0.5
    %v1397 = vtanh.pop %v1384
    %v1398 = vmul.f32 %v1395, %v1235
    %v1399 = vmul.f32 %v1394, %v1397
    %v1400 = vadd.f32 %v1398, %v1399
    %v1401 = vtanh.pop %v1400
    %v1402 = vmul.f32 %v1396, %v1401
    %1403 = vst [vmem:[#allocation2 + $0x28] sm:$0xff] %v1402
    %1404 = vmatprep.subr.mxu0 %v351
    %1405 = vmatpush1.msra.mxu0 %v350
    %1406 = vmatprep.subr.mxu0 %v355
    %1407 = vmatpush1.msra.mxu0 %v354
    %1408 = vmatprep.subr.mxu0 %v359
    %1409 = vmatpush1.msra.mxu0 %v358
    %1410 = vmatprep.subr.mxu0 %v363
    %1411 = vmatpush1.msra.mxu0 %v362
    %1412 = vmatprep.subr.mxu0 %v367
    %1413 = vmatpush1.msra.mxu0 %v366
    %1414 = vmatprep.subr.mxu0 %v371
    %1415 = vmatpush1.msra.mxu0 %v370
    %1416 = vmatprep.subr.mxu0 %v375
    %1417 = vmatpush1.msra.mxu0 %v374
    %1418 = vmatprep.subr.mxu0 %v379
    %1419 = vmatpush1.msra.mxu0 %v378
    %1420 = vmatprep.subr.mxu0 %v383
    %1421 = vmatpush1.msra.mxu0 %v382
    %1422 = vmatprep.subr.mxu0 %v387
    %1423 = vmatpush1.msra.mxu0 %v386
    %1424 = vmatprep.subr.mxu0 %v391
    %1425 = vmatpush1.msra.mxu0 %v390
    %1426 = vmatprep.subr.mxu0 %v395
    %1427 = vmatpush1.msra.mxu0 %v394
    %1428 = vmatprep.subr.mxu0 %v399
    %1429 = vmatpush1.msra.mxu0 %v398
    %1430 = vmatprep.subr.mxu0 %v403
    %1431 = vmatpush1.msra.mxu0 %v402
    %1432 = vmatprep.subr.mxu0 %v407
    %1433 = vmatpush1.msra.mxu0 %v406
    %1434 = vmatprep.subr.mxu0 %v411
    %1435 = vmatpush1.msra.mxu0 %v410
    %1436 = vmatprep.subr.mxu0 0.0
    %1437 = vmatpush1.msra.mxu0 0.0
    %1438 = vmatprep.subr.mxu0 0.0
    %1439 = vmatpush1.msra.mxu0 0.0
    %1440 = vmatprep.subr.mxu0 0.0
    %1441 = vmatpush1.msra.mxu0 0.0
    %1442 = vmatprep.subr.mxu0 0.0
    %1443 = vmatpush1.msra.mxu0 0.0
    %1444 = vmatprep.subr.mxu0 0.0
    %1445 = vmatpush1.msra.mxu0 0.0
    %1446 = vmatprep.subr.mxu0 0.0
    %1447 = vmatpush1.msra.mxu0 0.0
    %1448 = vmatprep.subr.mxu0 0.0
    %1449 = vmatpush1.msra.mxu0 0.0
    %1450 = vmatprep.subr.mxu0 0.0
    %1451 = vmatpush1.msra.mxu0 0.0
    %1452 = vmatprep.subr.mxu0 0.0
    %1453 = vmatpush1.msra.mxu0 0.0
    %1454 = vmatprep.subr.mxu0 0.0
    %1455 = vmatpush1.msra.mxu0 0.0
    %1456 = vmatprep.subr.mxu0 0.0
    %1457 = vmatpush1.msra.mxu0 0.0
    %1458 = vmatprep.subr.mxu0 0.0
    %1459 = vmatpush1.msra.mxu0 0.0
    %1460 = vmatprep.subr.mxu0 0.0
    %1461 = vmatpush1.msra.mxu0 0.0
    %1462 = vmatprep.subr.mxu0 0.0
    %1463 = vmatpush1.msra.mxu0 0.0
    %1464 = vmatprep.subr.mxu0 0.0
    %1465 = vmatpush1.msra.mxu0 0.0
    %1466 = vmatprep.subr.mxu0 0.0
    %1467 = vmatpush1.msra.mxu0 0.0
    %1468 = vmatprep.mubr.f32.mxu0 0.0
    %1469 = vmatmul.mubr.f32.gmra.mrb[0].mxu0 %v1402
    %v1470 = vpop.f32.mrb[0].mxu0
    %v1471 = vadd.f32 0.0, %v1470
    %v1472 = vpop.f32.mrb[0].mxu0
    %v1473 = vadd.f32 0.0, %v1472
    %1474 = vdwg.mxu0
    %1475 = vmatprep.subr.mxu0 %v353
    %1476 = vmatpush1.msra.mxu0 %v352
    %1477 = vmatprep.subr.mxu0 %v357
    %1478 = vmatpush1.msra.mxu0 %v356
    %1479 = vmatprep.subr.mxu0 %v361
    %1480 = vmatpush1.msra.mxu0 %v360
    %1481 = vmatprep.subr.mxu0 %v365
    %1482 = vmatpush1.msra.mxu0 %v364
    %1483 = vmatprep.subr.mxu0 %v369
    %1484 = vmatpush1.msra.mxu0 %v368
    %1485 = vmatprep.subr.mxu0 %v373
    %1486 = vmatpush1.msra.mxu0 %v372
    %1487 = vmatprep.subr.mxu0 %v377
    %1488 = vmatpush1.msra.mxu0 %v376
    %1489 = vmatprep.subr.mxu0 %v381
    %1490 = vmatpush1.msra.mxu0 %v380
    %1491 = vmatprep.subr.mxu0 %v385
    %1492 = vmatpush1.msra.mxu0 %v384
    %1493 = vmatprep.subr.mxu0 %v389
    %1494 = vmatpush1.msra.mxu0 %v388
    %1495 = vmatprep.subr.mxu0 %v393
    %1496 = vmatpush1.msra.mxu0 %v392
    %1497 = vmatprep.subr.mxu0 %v397
    %1498 = vmatpush1.msra.mxu0 %v396
    %1499 = vmatprep.subr.mxu0 %v401
    %1500 = vmatpush1.msra.mxu0 %v400
    %1501 = vmatprep.subr.mxu0 %v405
    %1502 = vmatpush1.msra.mxu0 %v404
    %1503 = vmatprep.subr.mxu0 %v409
    %1504 = vmatpush1.msra.mxu0 %v408
    %1505 = vmatprep.subr.mxu0 %v413
    %1506 = vmatpush1.msra.mxu0 %v412
    %1507 = vmatprep.subr.mxu0 0.0
    %1508 = vmatpush1.msra.mxu0 0.0
    %1509 = vmatprep.subr.mxu0 0.0
    %1510 = vmatpush1.msra.mxu0 0.0
    %1511 = vmatprep.subr.mxu0 0.0
    %1512 = vmatpush1.msra.mxu0 0.0
    %1513 = vmatprep.subr.mxu0 0.0
    %1514 = vmatpush1.msra.mxu0 0.0
    %1515 = vmatprep.subr.mxu0 0.0
    %1516 = vmatpush1.msra.mxu0 0.0
    %1517 = vmatprep.subr.mxu0 0.0
    %1518 = vmatpush1.msra.mxu0 0.0
    %1519 = vmatprep.subr.mxu0 0.0
    %1520 = vmatpush1.msra.mxu0 0.0
    %1521 = vmatprep.subr.mxu0 0.0
    %1522 = vmatpush1.msra.mxu0 0.0
    %1523 = vmatprep.subr.mxu0 0.0
    %1524 = vmatpush1.msra.mxu0 0.0
    %1525 = vmatprep.subr.mxu0 0.0
    %1526 = vmatpush1.msra.mxu0 0.0
    %1527 = vmatprep.subr.mxu0 0.0
    %1528 = vmatpush1.msra.mxu0 0.0
    %1529 = vmatprep.subr.mxu0 0.0
    %1530 = vmatpush1.msra.mxu0 0.0
    %1531 = vmatprep.subr.mxu0 0.0
    %1532 = vmatpush1.msra.mxu0 0.0
    %1533 = vmatprep.subr.mxu0 0.0
    %1534 = vmatpush1.msra.mxu0 0.0
    %1535 = vmatprep.subr.mxu0 0.0
    %1536 = vmatpush1.msra.mxu0 0.0
    %1537 = vmatprep.subr.mxu0 0.0
    %1538 = vmatpush1.msra.mxu0 0.0
    %1539 = vmatprep.mubr.f32.mxu0 0.0
    %1540 = vmatmul.mubr.f32.gmra.mrb[0].mxu0 %v1402
    %v1541 = vpop.f32.mrb[0].mxu0
    %v1542 = vadd.f32 0.0, %v1541
    %v1543 = vpop.f32.mrb[0].mxu0
    %v1544 = vadd.f32 0.0, %v1543
    %1545 = vdwg.mxu0
    %v1546 = vadd.f32 %v227, %v1471
    %v1547 = vadd.f32 %v229, %v1473
    %v1548 = vadd.f32 %v340, %v1542
    %v1549 = vadd.f32 %v342, %v1544
    %v1550 = vmul.f32 %v1546, 0.5
    %v1551 = vmul.f32 %v1547, 0.5
    %v1552 = vmul.f32 %v1548, 0.5
    %v1553 = vtanh.pop %v1550
    %v1554 = vtanh.pop %v1551
    %v1555 = vtanh.pop %v1552
    %v1556 = vadd.f32 %v1553, 1.0
    %v1557 = vadd.f32 %v1554, 1.0
    %v1558 = vadd.f32 %v1555, 1.0
    %v1559 = vmul.f32 %v1556, 0.5
    %v1560 = vmul.f32 %v1557, 0.5
    %v1561 = vmul.f32 %v1558, 0.5
    %v1562 = vtanh.pop %v1549
    %v1563 = vmul.f32 %v1560, %v1400
    %v1564 = vmul.f32 %v1559, %v1562
    %v1565 = vadd.f32 %v1563, %v1564
    %v1566 = vtanh.pop %v1565
    %v1567 = vmul.f32 %v1561, %v1566
    %1568 = vst [vmem:[#allocation2 + $0x30] sm:$0xff] %v1567
    %1569 = vmatprep.subr.mxu0 %v351
    %1570 = vmatpush1.msra.mxu0 %v350
    %1571 = vmatprep.subr.mxu0 %v355
    %1572 = vmatpush1.msra.mxu0 %v354
    %1573 = vmatprep.subr.mxu0 %v359
    %1574 = vmatpush1.msra.mxu0 %v358
    %1575 = vmatprep.subr.mxu0 %v363
    %1576 = vmatpush1.msra.mxu0 %v362
    %1577 = vmatprep.subr.mxu0 %v367
    %1578 = vmatpush1.msra.mxu0 %v366
    %1579 = vmatprep.subr.mxu0 %v371
    %1580 = vmatpush1.msra.mxu0 %v370
    %1581 = vmatprep.subr.mxu0 %v375
    %1582 = vmatpush1.msra.mxu0 %v374
    %1583 = vmatprep.subr.mxu0 %v379
    %1584 = vmatpush1.msra.mxu0 %v378
    %1585 = vmatprep.subr.mxu0 %v383
    %1586 = vmatpush1.msra.mxu0 %v382
    %1587 = vmatprep.subr.mxu0 %v387
    %1588 = vmatpush1.msra.mxu0 %v386
    %1589 = vmatprep.subr.mxu0 %v391
    %1590 = vmatpush1.msra.mxu0 %v390
    %1591 = vmatprep.subr.mxu0 %v395
    %1592 = vmatpush1.msra.mxu0 %v394
    %1593 = vmatprep.subr.mxu0 %v399
    %1594 = vmatpush1.msra.mxu0 %v398
    %1595 = vmatprep.subr.mxu0 %v403
    %1596 = vmatpush1.msra.mxu0 %v402
    %1597 = vmatprep.subr.mxu0 %v407
    %1598 = vmatpush1.msra.mxu0 %v406
    %1599 = vmatprep.subr.mxu0 %v411
    %1600 = vmatpush1.msra.mxu0 %v410
    %1601 = vmatprep.subr.mxu0 0.0
    %1602 = vmatpush1.msra.mxu0 0.0
    %1603 = vmatprep.subr.mxu0 0.0
    %1604 = vmatpush1.msra.mxu0 0.0
    %1605 = vmatprep.subr.mxu0 0.0
    %1606 = vmatpush1.msra.mxu0 0.0
    %1607 = vmatprep.subr.mxu0 0.0
    %1608 = vmatpush1.msra.mxu0 0.0
    %1609 = vmatprep.subr.mxu0 0.0
    %1610 = vmatpush1.msra.mxu0 0.0
    %1611 = vmatprep.subr.mxu0 0.0
    %1612 = vmatpush1.msra.mxu0 0.0
    %1613 = vmatprep.subr.mxu0 0.0
    %1614 = vmatpush1.msra.mxu0 0.0
    %1615 = vmatprep.subr.mxu0 0.0
    %1616 = vmatpush1.msra.mxu0 0.0
    %1617 = vmatprep.subr.mxu0 0.0
    %1618 = vmatpush1.msra.mxu0 0.0
    %1619 = vmatprep.subr.mxu0 0.0
    %1620 = vmatpush1.msra.mxu0 0.0
    %1621 = vmatprep.subr.mxu0 0.0
    %1622 = vmatpush1.msra.mxu0 0.0
    %1623 = vmatprep.subr.mxu0 0.0
    %1624 = vmatpush1.msra.mxu0 0.0
    %1625 = vmatprep.subr.mxu0 0.0
    %1626 = vmatpush1.msra.mxu0 0.0
    %1627 = vmatprep.subr.mxu0 0.0
    %1628 = vmatpush1.msra.mxu0 0.0
    %1629 = vmatprep.subr.mxu0 0.0
    %1630 = vmatpush1.msra.mxu0 0.0
    %1631 = vmatprep.subr.mxu0 0.0
    %1632 = vmatpush1.msra.mxu0 0.0
    %1633 = vmatprep.mubr.f32.mxu0 0.0
    %1634 = vmatmul.mubr.f32.gmra.mrb[0].mxu0 %v1567
    %v1635 = vpop.f32.mrb[0].mxu0
    %v1636 = vadd.f32 0.0, %v1635
    %v1637 = vpop.f32.mrb[0].mxu0
    %v1638 = vadd.f32 0.0, %v1637
    %1639 = vdwg.mxu0
    %1640 = vmatprep.subr.mxu0 %v353
    %1641 = vmatpush1.msra.mxu0 %v352
    %1642 = vmatprep.subr.mxu0 %v357
    %1643 = vmatpush1.msra.mxu0 %v356
    %1644 = vmatprep.subr.mxu0 %v361
    %1645 = vmatpush1.msra.mxu0 %v360
    %1646 = vmatprep.subr.mxu0 %v365
    %1647 = vmatpush1.msra.mxu0 %v364
    %1648 = vmatprep.subr.mxu0 %v369
    %1649 = vmatpush1.msra.mxu0 %v368
    %1650 = vmatprep.subr.mxu0 %v373
    %1651 = vmatpush1.msra.mxu0 %v372
    %1652 = vmatprep.subr.mxu0 %v377
    %1653 = vmatpush1.msra.mxu0 %v376
    %1654 = vmatprep.subr.mxu0 %v381
    %1655 = vmatpush1.msra.mxu0 %v380
    %1656 = vmatprep.subr.mxu0 %v385
    %1657 = vmatpush1.msra.mxu0 %v384
    %1658 = vmatprep.subr.mxu0 %v389
    %1659 = vmatpush1.msra.mxu0 %v388
    %1660 = vmatprep.subr.mxu0 %v393
    %1661 = vmatpush1.msra.mxu0 %v392
    %1662 = vmatprep.subr.mxu0 %v397
    %1663 = vmatpush1.msra.mxu0 %v396
    %1664 = vmatprep.subr.mxu0 %v401
    %1665 = vmatpush1.msra.mxu0 %v400
    %1666 = vmatprep.subr.mxu0 %v405
    %1667 = vmatpush1.msra.mxu0 %v404
    %1668 = vmatprep.subr.mxu0 %v409
    %1669 = vmatpush1.msra.mxu0 %v408
    %1670 = vmatprep.subr.mxu0 %v413
    %1671 = vmatpush1.msra.mxu0 %v412
    %1672 = vmatprep.subr.mxu0 0.0
    %1673 = vmatpush1.msra.mxu0 0.0
    %1674 = vmatprep.subr.mxu0 0.0
    %1675 = vmatpush1.msra.mxu0 0.0
    %1676 = vmatprep.subr.mxu0 0.0
    %1677 = vmatpush1.msra.mxu0 0.0
    %1678 = vmatprep.subr.mxu0 0.0
    %1679 = vmatpush1.msra.mxu0 0.0
    %1680 = vmatprep.subr.mxu0 0.0
    %1681 = vmatpush1.msra.mxu0 0.0
    %1682 = vmatprep.subr.mxu0 0.0
    %1683 = vmatpush1.msra.mxu0 0.0
    %1684 = vmatprep.subr.mxu0 0.0
    %1685 = vmatpush1.msra.mxu0 0.0
    %1686 = vmatprep.subr.mxu0 0.0
    %1687 = vmatpush1.msra.mxu0 0.0
    %1688 = vmatprep.subr.mxu0 0.0
    %1689 = vmatpush1.msra.mxu0 0.0
    %1690 = vmatprep.subr.mxu0 0.0
    %1691 = vmatpush1.msra.mxu0 0.0
    %1692 = vmatprep.subr.mxu0 0.0
    %1693 = vmatpush1.msra.mxu0 0.0
    %1694 = vmatprep.subr.mxu0 0.0
    %1695 = vmatpush1.msra.mxu0 0.0
    %1696 = vmatprep.subr.mxu0 0.0
    %1697 = vmatpush1.msra.mxu0 0.0
    %1698 = vmatprep.subr.mxu0 0.0
    %1699 = vmatpush1.msra.mxu0 0.0
    %1700 = vmatprep.subr.mxu0 0.0
    %1701 = vmatpush1.msra.mxu0 0.0
    %1702 = vmatprep.subr.mxu0 0.0
    %1703 = vmatpush1.msra.mxu0 0.0
    %1704 = vmatprep.mubr.f32.mxu0 0.0
    %1705 = vmatmul.mubr.f32.gmra.mrb[0].mxu0 %v1567
    %v1706 = vpop.f32.mrb[0].mxu0
    %v1707 = vadd.f32 0.0, %v1706
    %v1708 = vpop.f32.mrb[0].mxu0
    %v1709 = vadd.f32 0.0, %v1708
    %1710 = vdwg.mxu0
    %v1711 = vadd.f32 %v233, %v1636
    %v1712 = vadd.f32 %v235, %v1638
    %v1713 = vadd.f32 %v346, %v1707
    %v1714 = vadd.f32 %v348, %v1709
    %v1715 = vmul.f32 %v1711, 0.5
    %v1716 = vmul.f32 %v1712, 0.5
    %v1717 = vmul.f32 %v1713, 0.5
    %v1718 = vtanh.pop %v1715
    %v1719 = vtanh.pop %v1716
    %v1720 = vtanh.pop %v1717
    %v1721 = vadd.f32 %v1718, 1.0
    %v1722 = vadd.f32 %v1719, 1.0
    %v1723 = vadd.f32 %v1720, 1.0
    %v1724 = vmul.f32 %v1721, 0.5
    %v1725 = vmul.f32 %v1722, 0.5
    %v1726 = vmul.f32 %v1723, 0.5
    %v1727 = vtanh.pop %v1714
    %v1728 = vmul.f32 %v1725, %v1565
    %v1729 = vmul.f32 %v1724, %v1727
    %v1730 = vadd.f32 %v1728, %v1729
    %v1731 = vtanh.pop %v1730
    %v1732 = vmul.f32 %v1726, %v1731
    %1733 = vst [vmem:[#allocation2 + $0x38] sm:$0xff] %v1732
    %v1734 = vld [vmem:[#allocation2] sm:$0xff]
    %v1735 = vld [vmem:[#allocation2 + $0x8] sm:$0xff]
    %v1736 = vld [vmem:[#allocation2 + $0x10] sm:$0xff]
    %v1737 = vld [vmem:[#allocation2 + $0x18] sm:$0xff]
    %v1738 = vld [vmem:[#allocation2 + $0x20] sm:$0xff]
    %v1739 = vld [vmem:[#allocation2 + $0x28] sm:$0xff]
    %v1740 = vld [vmem:[#allocation2 + $0x30] sm:$0xff]
    %v1741 = vld [vmem:[#allocation2 + $0x38] sm:$0xff]
    %v1742 = vld [vmem:[#allocation6] sm:$0xff]
    %v1743 = vld [vmem:[#allocation6 + $0x8] sm:$0xff]
    %v1744 = vld [vmem:[#allocation6 + $0x10] sm:$0xff]
    %v1745 = vld [vmem:[#allocation6 + $0x18] sm:$0xff]
    %v1746 = vld [vmem:[#allocation6 + $0x20] sm:$0xff]
    %v1747 = vld [vmem:[#allocation6 + $0x28] sm:$0xff]
    %v1748 = vld [vmem:[#allocation6 + $0x30] sm:$0xff]
    %v1749 = vld [vmem:[#allocation6 + $0x38] sm:$0xff]
    %v1750 = vld [vmem:[#allocation6 + $0x40] sm:$0xff]
    %v1751 = vld [vmem:[#allocation6 + $0x48] sm:$0xff]
    %v1752 = vld [vmem:[#allocation6 + $0x50] sm:$0xff]
    %v1753 = vld [vmem:[#allocation6 + $0x58] sm:$0xff]
    %v1754 = vld [vmem:[#allocation6 + $0x60] sm:$0xff]
    %v1755 = vld [vmem:[#allocation6 + $0x68] sm:$0xff]
    %v1756 = vld [vmem:[#allocation6 + $0x70] sm:$0xff]
    %v1757 = vld [vmem:[#allocation6 + $0x78] sm:$0xff]
    %v1758 = vld [vmem:[#allocation6 + $0x80] sm:$0xff]
    %v1759 = vld [vmem:[#allocation6 + $0x88] sm:$0xff]
    %v1760 = vld [vmem:[#allocation6 + $0x90] sm:$0xff]
    %v1761 = vld [vmem:[#allocation6 + $0x98] sm:$0xff]
    %v1762 = vld [vmem:[#allocation6 + $0xa0] sm:$0xff]
    %v1763 = vld [vmem:[#allocation6 + $0xa8] sm:$0xff]
    %v1764 = vld [vmem:[#allocation6 + $0xb0] sm:$0xff]
    %v1765 = vld [vmem:[#allocation6 + $0xb8] sm:$0xff]
    %v1766 = vld [vmem:[#allocation6 + $0xc0] sm:$0xff]
    %v1767 = vld [vmem:[#allocation6 + $0xc8] sm:$0xff]
    %v1768 = vld [vmem:[#allocation6 + $0xd0] sm:$0xff]
    %v1769 = vld [vmem:[#allocation6 + $0xd8] sm:$0xff]
    %v1770 = vld [vmem:[#allocation6 + $0xe0] sm:$0xff]
    %v1771 = vld [vmem:[#allocation6 + $0xe8] sm:$0xff]
    %v1772 = vld [vmem:[#allocation6 + $0xf0] sm:$0xff]
    %v1773 = vld [vmem:[#allocation6 + $0xf8] sm:$0xff]
    %v1774 = vld [vmem:[#allocation6 + $0x100] sm:$0xff]
    %v1775 = vld [vmem:[#allocation6 + $0x108] sm:$0xff]
    %v1776 = vld [vmem:[#allocation6 + $0x110] sm:$0xff]
    %v1777 = vld [vmem:[#allocation6 + $0x118] sm:$0xff]
    %v1778 = vld [vmem:[#allocation6 + $0x120] sm:$0xff]
    %v1779 = vld [vmem:[#allocation6 + $0x128] sm:$0xff]
    %v1780 = vld [vmem:[#allocation6 + $0x130] sm:$0xff]
    %v1781 = vld [vmem:[#allocation6 + $0x138] sm:$0xff]
    %v1782 = vld [vmem:[#allocation6 + $0x140] sm:$0xff]
    %v1783 = vld [vmem:[#allocation6 + $0x148] sm:$0xff]
    %v1784 = vld [vmem:[#allocation6 + $0x150] sm:$0xff]
    %v1785 = vld [vmem:[#allocation6 + $0x158] sm:$0xff]
    %v1786 = vld [vmem:[#allocation6 + $0x160] sm:$0xff]
    %v1787 = vld [vmem:[#allocation6 + $0x168] sm:$0xff]
    %v1788 = vld [vmem:[#allocation6 + $0x170] sm:$0xff]
    %v1789 = vld [vmem:[#allocation6 + $0x178] sm:$0xff]
    %v1790 = vld [vmem:[#allocation6 + $0x180] sm:$0xff]
    %v1791 = vld [vmem:[#allocation6 + $0x188] sm:$0xff]
    %v1792 = vld [vmem:[#allocation6 + $0x190] sm:$0xff]
    %v1793 = vld [vmem:[#allocation6 + $0x198] sm:$0xff]
    %v1794 = vld [vmem:[#allocation6 + $0x1a0] sm:$0xff]
    %v1795 = vld [vmem:[#allocation6 + $0x1a8] sm:$0xff]
    %v1796 = vld [vmem:[#allocation6 + $0x1b0] sm:$0xff]
    %v1797 = vld [vmem:[#allocation6 + $0x1b8] sm:$0xff]
    %v1798 = vld [vmem:[#allocation6 + $0x1c0] sm:$0xff]
    %v1799 = vld [vmem:[#allocation6 + $0x1c8] sm:$0xff]
    %v1800 = vld [vmem:[#allocation6 + $0x1d0] sm:$0xff]
    %v1801 = vld [vmem:[#allocation6 + $0x1d8] sm:$0xff]
    %v1802 = vld [vmem:[#allocation6 + $0x1e0] sm:$0xff]
    %v1803 = vld [vmem:[#allocation6 + $0x1e8] sm:$0xff]
    %v1804 = vld [vmem:[#allocation6 + $0x1f0] sm:$0xff]
    %v1805 = vld [vmem:[#allocation6 + $0x1f8] sm:$0xff]
    %v1806 = vld [vmem:[%s5] sm:$0xf]
    %v1808 = vlaneseq
    %v1809 = vshrl.u32 %v1808, 7
    %v1810 = vsub.s32 0, %v1809
    %v1811 = vrot.slane %v1806, %v1810
    %v1812 = vlaneseq
    %v1813 = vshrl.u32 %v1812, 7
    %v1814 = vsub.s32 1, %v1813
    %v1815 = vrot.slane %v1806, %v1814
    %v1816 = vlaneseq
    %v1817 = vshrl.u32 %v1816, 7
    %v1818 = vsub.s32 2, %v1817
    %v1819 = vrot.slane %v1806, %v1818
    %v1820 = vlaneseq
    %v1821 = vshrl.u32 %v1820, 7
    %v1822 = vsub.s32 3, %v1821
    %v1823 = vrot.slane %v1806, %v1822
    %1828 = vmatprep.subr.mxu0 %v1743
    %1829 = vmatpush1.msra.mxu0 %v1742
    %1830 = vmatprep.subr.mxu0 %v1747
    %1831 = vmatpush1.msra.mxu0 %v1746
    %1832 = vmatprep.subr.mxu0 %v1751
    %1833 = vmatpush1.msra.mxu0 %v1750
    %1834 = vmatprep.subr.mxu0 %v1755
    %1835 = vmatpush1.msra.mxu0 %v1754
    %1836 = vmatprep.subr.mxu0 %v1759
    %1837 = vmatpush1.msra.mxu0 %v1758
    %1838 = vmatprep.subr.mxu0 %v1763
    %1839 = vmatpush1.msra.mxu0 %v1762
    %1840 = vmatprep.subr.mxu0 %v1767
    %1841 = vmatpush1.msra.mxu0 %v1766
    %1842 = vmatprep.subr.mxu0 %v1771
    %1843 = vmatpush1.msra.mxu0 %v1770
    %1844 = vmatprep.subr.mxu0 %v1775
    %1845 = vmatpush1.msra.mxu0 %v1774
    %1846 = vmatprep.subr.mxu0 %v1779
    %1847 = vmatpush1.msra.mxu0 %v1778
    %1848 = vmatprep.subr.mxu0 %v1783
    %1849 = vmatpush1.msra.mxu0 %v1782
    %1850 = vmatprep.subr.mxu0 %v1787
    %1851 = vmatpush1.msra.mxu0 %v1786
    %1852 = vmatprep.subr.mxu0 %v1791
    %1853 = vmatpush1.msra.mxu0 %v1790
    %1854 = vmatprep.subr.mxu0 %v1795
    %1855 = vmatpush1.msra.mxu0 %v1794
    %1856 = vmatprep.subr.mxu0 %v1799
    %1857 = vmatpush1.msra.mxu0 %v1798
    %1858 = vmatprep.subr.mxu0 %v1803
    %1859 = vmatpush1.msra.mxu0 %v1802
    %1860 = vmatprep.subr.mxu0 0.0
    %1861 = vmatpush1.msra.mxu0 0.0
    %1862 = vmatprep.subr.mxu0 0.0
    %1863 = vmatpush1.msra.mxu0 0.0
    %1864 = vmatprep.subr.mxu0 0.0
    %1865 = vmatpush1.msra.mxu0 0.0
    %1866 = vmatprep.subr.mxu0 0.0
    %1867 = vmatpush1.msra.mxu0 0.0
    %1868 = vmatprep.subr.mxu0 0.0
    %1869 = vmatpush1.msra.mxu0 0.0
    %1870 = vmatprep.subr.mxu0 0.0
    %1871 = vmatpush1.msra.mxu0 0.0
    %1872 = vmatprep.subr.mxu0 0.0
    %1873 = vmatpush1.msra.mxu0 0.0
    %1874 = vmatprep.subr.mxu0 0.0
    %1875 = vmatpush1.msra.mxu0 0.0
    %1876 = vmatprep.subr.mxu0 0.0
    %1877 = vmatpush1.msra.mxu0 0.0
    %1878 = vmatprep.subr.mxu0 0.0
    %1879 = vmatpush1.msra.mxu0 0.0
    %1880 = vmatprep.subr.mxu0 0.0
    %1881 = vmatpush1.msra.mxu0 0.0
    %1882 = vmatprep.subr.mxu0 0.0
    %1883 = vmatpush1.msra.mxu0 0.0
    %1884 = vmatprep.subr.mxu0 0.0
    %1885 = vmatpush1.msra.mxu0 0.0
    %1886 = vmatprep.subr.mxu0 0.0
    %1887 = vmatpush1.msra.mxu0 0.0
    %1888 = vmatprep.subr.mxu0 0.0
    %1889 = vmatpush1.msra.mxu0 0.0
    %1890 = vmatprep.subr.mxu0 0.0
    %1891 = vmatpush1.msra.mxu0 0.0
    %1892 = vmatprep.mubr.f32.mxu0 0.0
    %1893 = vmatmul.mubr.f32.gmra.mrb[0].mxu0 %v1734
    %v1894 = vpop.f32.mrb[0].mxu0
    %v1895 = vadd.f32 %v1811, %v1894
    %v1896 = vpop.f32.mrb[0].mxu0
    %v1897 = vadd.f32 %v1815, %v1896
    %1898 = vmatprep.mubr.f32.mxu0 0.0
    %1899 = vmatmul.mubr.f32.gmra.mrb[0].mxu0 %v1735
    %v1900 = vpop.f32.mrb[0].mxu0
    %v1901 = vadd.f32 %v1811, %v1900
    %v1902 = vpop.f32.mrb[0].mxu0
    %v1903 = vadd.f32 %v1815, %v1902
    %1904 = vmatprep.mubr.f32.mxu0 0.0
    %1905 = vmatmul.mubr.f32.gmra.mrb[0].mxu0 %v1736
    %v1906 = vpop.f32.mrb[0].mxu0
    %v1907 = vadd.f32 %v1811, %v1906
    %v1908 = vpop.f32.mrb[0].mxu0
    %v1909 = vadd.f32 %v1815, %v1908
    %1910 = vmatprep.mubr.f32.mxu0 0.0
    %1911 = vmatmul.mubr.f32.gmra.mrb[0].mxu0 %v1737
    %v1912 = vpop.f32.mrb[0].mxu0
    %v1913 = vadd.f32 %v1811, %v1912
    %v1914 = vpop.f32.mrb[0].mxu0
    %v1915 = vadd.f32 %v1815, %v1914
    %1916 = vmatprep.mubr.f32.mxu0 0.0
    %1917 = vmatmul.mubr.f32.gmra.mrb[0].mxu0 %v1738
    %v1918 = vpop.f32.mrb[0].mxu0
    %v1919 = vadd.f32 %v1811, %v1918
    %v1920 = vpop.f32.mrb[0].mxu0
    %v1921 = vadd.f32 %v1815, %v1920
    %1922 = vmatprep.mubr.f32.mxu0 0.0
    %1923 = vmatmul.mubr.f32.gmra.mrb[0].mxu0 %v1739
    %v1924 = vpop.f32.mrb[0].mxu0
    %v1925 = vadd.f32 %v1811, %v1924
    %v1926 = vpop.f32.mrb[0].mxu0
    %v1927 = vadd.f32 %v1815, %v1926
    %1928 = vmatprep.mubr.f32.mxu0 0.0
    %1929 = vmatmul.mubr.f32.gmra.mrb[0].mxu0 %v1740
    %v1930 = vpop.f32.mrb[0].mxu0
    %v1931 = vadd.f32 %v1811, %v1930
    %v1932 = vpop.f32.mrb[0].mxu0
    %v1933 = vadd.f32 %v1815, %v1932
    %1934 = vmatprep.mubr.f32.mxu0 0.0
    %1935 = vmatmul.mubr.f32.gmra.mrb[0].mxu0 %v1741
    %v1936 = vpop.f32.mrb[0].mxu0
    %v1937 = vadd.f32 %v1811, %v1936
    %v1938 = vpop.f32.mrb[0].mxu0
    %v1939 = vadd.f32 %v1815, %v1938
    %1940 = vdwg.mxu0
    %1941 = vmatprep.subr.mxu0 %v1745
    %1942 = vmatpush1.msra.mxu0 %v1744
    %1943 = vmatprep.subr.mxu0 %v1749
    %1944 = vmatpush1.msra.mxu0 %v1748
    %1945 = vmatprep.subr.mxu0 %v1753
    %1946 = vmatpush1.msra.mxu0 %v1752
    %1947 = vmatprep.subr.mxu0 %v1757
    %1948 = vmatpush1.msra.mxu0 %v1756
    %1949 = vmatprep.subr.mxu0 %v1761
    %1950 = vmatpush1.msra.mxu0 %v1760
    %1951 = vmatprep.subr.mxu0 %v1765
    %1952 = vmatpush1.msra.mxu0 %v1764
    %1953 = vmatprep.subr.mxu0 %v1769
    %1954 = vmatpush1.msra.mxu0 %v1768
    %1955 = vmatprep.subr.mxu0 %v1773
    %1956 = vmatpush1.msra.mxu0 %v1772
    %1957 = vmatprep.subr.mxu0 %v1777
    %1958 = vmatpush1.msra.mxu0 %v1776
    %1959 = vmatprep.subr.mxu0 %v1781
    %1960 = vmatpush1.msra.mxu0 %v1780
    %1961 = vmatprep.subr.mxu0 %v1785
    %1962 = vmatpush1.msra.mxu0 %v1784
    %1963 = vmatprep.subr.mxu0 %v1789
    %1964 = vmatpush1.msra.mxu0 %v1788
    %1965 = vmatprep.subr.mxu0 %v1793
    %1966 = vmatpush1.msra.mxu0 %v1792
    %1967 = vmatprep.subr.mxu0 %v1797
    %1968 = vmatpush1.msra.mxu0 %v1796
    %1969 = vmatprep.subr.mxu0 %v1801
    %1970 = vmatpush1.msra.mxu0 %v1800
    %1971 = vmatprep.subr.mxu0 %v1805
    %1972 = vmatpush1.msra.mxu0 %v1804
    %1973 = vmatprep.subr.mxu0 0.0
    %1974 = vmatpush1.msra.mxu0 0.0
    %1975 = vmatprep.subr.mxu0 0.0
    %1976 = vmatpush1.msra.mxu0 0.0
    %1977 = vmatprep.subr.mxu0 0.0
    %1978 = vmatpush1.msra.mxu0 0.0
    %1979 = vmatprep.subr.mxu0 0.0
    %1980 = vmatpush1.msra.mxu0 0.0
    %1981 = vmatprep.subr.mxu0 0.0
    %1982 = vmatpush1.msra.mxu0 0.0
    %1983 = vmatprep.subr.mxu0 0.0
    %1984 = vmatpush1.msra.mxu0 0.0
    %1985 = vmatprep.subr.mxu0 0.0
    %1986 = vmatpush1.msra.mxu0 0.0
    %1987 = vmatprep.subr.mxu0 0.0
    %1988 = vmatpush1.msra.mxu0 0.0
    %1989 = vmatprep.subr.mxu0 0.0
    %1990 = vmatpush1.msra.mxu0 0.0
    %1991 = vmatprep.subr.mxu0 0.0
    %1992 = vmatpush1.msra.mxu0 0.0
    %1993 = vmatprep.subr.mxu0 0.0
    %1994 = vmatpush1.msra.mxu0 0.0
    %1995 = vmatprep.subr.mxu0 0.0
    %1996 = vmatpush1.msra.mxu0 0.0
    %1997 = vmatprep.subr.mxu0 0.0
    %1998 = vmatpush1.msra.mxu0 0.0
    %1999 = vmatprep.subr.mxu0 0.0
    %2000 = vmatpush1.msra.mxu0 0.0
    %2001 = vmatprep.subr.mxu0 0.0
    %2002 = vmatpush1.msra.mxu0 0.0
    %2003 = vmatprep.subr.mxu0 0.0
    %2004 = vmatpush1.msra.mxu0 0.0
    %2005 = vmatprep.mubr.f32.mxu0 0.0
    %2006 = vmatmul.mubr.f32.gmra.mrb[0].mxu0 %v1734
    %v2007 = vpop.f32.mrb[0].mxu0
    %v2008 = vadd.f32 %v1819, %v2007
    %v2009 = vpop.f32.mrb[0].mxu0
    %v2010 = vadd.f32 %v1823, %v2009
    %2011 = vmatprep.mubr.f32.mxu0 0.0
    %2012 = vmatmul.mubr.f32.gmra.mrb[0].mxu0 %v1735
    %v2013 = vpop.f32.mrb[0].mxu0
    %v2014 = vadd.f32 %v1819, %v2013
    %v2015 = vpop.f32.mrb[0].mxu0
    %v2016 = vadd.f32 %v1823, %v2015
    %2017 = vmatprep.mubr.f32.mxu0 0.0
    %2018 = vmatmul.mubr.f32.gmra.mrb[0].mxu0 %v1736
    %v2019 = vpop.f32.mrb[0].mxu0
    %v2020 = vadd.f32 %v1819, %v2019
    %v2021 = vpop.f32.mrb[0].mxu0
    %v2022 = vadd.f32 %v1823, %v2021
    %2023 = vmatprep.mubr.f32.mxu0 0.0
    %2024 = vmatmul.mubr.f32.gmra.mrb[0].mxu0 %v1737
    %v2025 = vpop.f32.mrb[0].mxu0
    %v2026 = vadd.f32 %v1819, %v2025
    %v2027 = vpop.f32.mrb[0].mxu0
    %v2028 = vadd.f32 %v1823, %v2027
    %2029 = vmatprep.mubr.f32.mxu0 0.0
    %2030 = vmatmul.mubr.f32.gmra.mrb[0].mxu0 %v1738
    %v2031 = vpop.f32.mrb[0].mxu0
    %v2032 = vadd.f32 %v1819, %v2031
    %v2033 = vpop.f32.mrb[0].mxu0
    %v2034 = vadd.f32 %v1823, %v2033
    %2035 = vmatprep.mubr.f32.mxu0 0.0
    %2036 = vmatmul.mubr.f32.gmra.mrb[0].mxu0 %v1739
    %v2037 = vpop.f32.mrb[0].mxu0
    %v2038 = vadd.f32 %v1819, %v2037
    %v2039 = vpop.f32.mrb[0].mxu0
    %v2040 = vadd.f32 %v1823, %v2039
    %2041 = vmatprep.mubr.f32.mxu0 0.0
    %2042 = vmatmul.mubr.f32.gmra.mrb[0].mxu0 %v1740
    %v2043 = vpop.f32.mrb[0].mxu0
    %v2044 = vadd.f32 %v1819, %v2043
    %v2045 = vpop.f32.mrb[0].mxu0
    %v2046 = vadd.f32 %v1823, %v2045
    %2047 = vmatprep.mubr.f32.mxu0 0.0
    %2048 = vmatmul.mubr.f32.gmra.mrb[0].mxu0 %v1741
    %v2049 = vpop.f32.mrb[0].mxu0
    %v2050 = vadd.f32 %v1819, %v2049
    %v2051 = vpop.f32.mrb[0].mxu0
    %v2052 = vadd.f32 %v1823, %v2051
    %2053 = vdwg.mxu0
    %2054 = vst [vmem:[#allocation8] sm:$0xff] %v1895
    %2055 = vst [vmem:[#allocation8 + $0x8] sm:$0xff] %v1897
    %2056 = vst [vmem:[#allocation8 + $0x10] sm:$0xff] %v2008
    %2057 = vst [vmem:[#allocation8 + $0x18] sm:$0xff] %v2010
    %2058 = vst [vmem:[#allocation8 + $0x20] sm:$0xff] %v1901
    %2059 = vst [vmem:[#allocation8 + $0x28] sm:$0xff] %v1903
    %2060 = vst [vmem:[#allocation8 + $0x30] sm:$0xff] %v2014
    %2061 = vst [vmem:[#allocation8 + $0x38] sm:$0xff] %v2016
    %2062 = vst [vmem:[#allocation8 + $0x40] sm:$0xff] %v1907
    %2063 = vst [vmem:[#allocation8 + $0x48] sm:$0xff] %v1909
    %2064 = vst [vmem:[#allocation8 + $0x50] sm:$0xff] %v2020
    %2065 = vst [vmem:[#allocation8 + $0x58] sm:$0xff] %v2022
    %2066 = vst [vmem:[#allocation8 + $0x60] sm:$0xff] %v1913
    %2067 = vst [vmem:[#allocation8 + $0x68] sm:$0xff] %v1915
    %2068 = vst [vmem:[#allocation8 + $0x70] sm:$0xff] %v2026
    %2069 = vst [vmem:[#allocation8 + $0x78] sm:$0xff] %v2028
    %2070 = vst [vmem:[#allocation8 + $0x80] sm:$0xff] %v1919
    %2071 = vst [vmem:[#allocation8 + $0x88] sm:$0xff] %v1921
    %2072 = vst [vmem:[#allocation8 + $0x90] sm:$0xff] %v2032
    %2073 = vst [vmem:[#allocation8 + $0x98] sm:$0xff] %v2034
    %2074 = vst [vmem:[#allocation8 + $0xa0] sm:$0xff] %v1925
    %2075 = vst [vmem:[#allocation8 + $0xa8] sm:$0xff] %v1927
    %2076 = vst [vmem:[#allocation8 + $0xb0] sm:$0xff] %v2038
    %2077 = vst [vmem:[#allocation8 + $0xb8] sm:$0xff] %v2040
    %2078 = vst [vmem:[#allocation8 + $0xc0] sm:$0xff] %v1931
    %2079 = vst [vmem:[#allocation8 + $0xc8] sm:$0xff] %v1933
    %2080 = vst [vmem:[#allocation8 + $0xd0] sm:$0xff] %v2044
    %2081 = vst [vmem:[#allocation8 + $0xd8] sm:$0xff] %v2046
    %2082 = vst [vmem:[#allocation8 + $0xe0] sm:$0xff] %v1937
    %2083 = vst [vmem:[#allocation8 + $0xe8] sm:$0xff] %v1939
    %2084 = vst [vmem:[#allocation8 + $0xf0] sm:$0xff] %v2050
    %2085 = vst [vmem:[#allocation8 + $0xf8] sm:$0xff] %v2052
    // Predicated region
    $region34: #{tpu_custom_call.1} parent=1 // pred_check
      _
    $region35: #{tpu_custom_call.1} parent=1 // pred_check_branch
      %2087 = sbr.rel (0) target = $region37
    $region36: #{tpu_custom_call.1} parent=1 // pred_region
      %s2089 = ssub.s32 4096, 4096
      %2090 = vsyncadd [#allocation5], %s2089
      %s2091 = sshll.u32 [#allocation8], 4
      %s2092 = int_to_ptr.vmem [resolvable:$true] %s2091
      %2097 = dma.vmem_to_hbm [thread:$0]  %s2092, 4096, %s6, [#allocation5], 512, 512, 32
    $region37: #{tpu_custom_call.1} parent=1 // pred_fallthru
      _
    // Predicated region
    $region38: #{tpu_custom_call.1} parent=1 // pred_check
      _
    $region39: #{tpu_custom_call.1} parent=1 // pred_check_branch
      %2099 = sbr.rel (0) target = $region41
    $region40: #{tpu_custom_call.1} parent=1 // pred_region
      %2100 = dma.done [#allocation5], 4096
    $region41: #{tpu_custom_call.1} parent=1 // pred_fallthru
      _
    %2101 = vsyncpa [#allocation4], 1
    %2102 = vsyncpa [#allocation7], 1
    %2103 = vsyncpa [#allocation5], 1

</llo_original>
